<compile_context>
chip_gen: v6e
topology: v6e:2x2x1
jax: 0.10.0
libtpu: 0.0.40
codegen_flags: <defaults>
</compile_context>

<pallas_src>
import functools

import jax
import jax.numpy as jnp
from jax.experimental import pallas as pl
from jax.experimental.pallas import tpu as pltpu


# ----------------------------- in-kernel helpers -----------------------------

def _layernorm(x, gamma, beta, eps=1e-5):
    # PyTorch nn.LayerNorm semantics: biased variance over last dim, eps=1e-5.
    mean = jnp.mean(x, axis=-1, keepdims=True)
    var = jnp.mean((x - mean) ** 2, axis=-1, keepdims=True)
    return (x - mean) * jax.lax.rsqrt(var + eps) * gamma + beta


# ----------------------------- fused GPT kernel -------------------------------

def _gpt_kernel(num_heads, seq_len,
                x_ref,                                   # (R, C) embedding rows chunk
                ln1_g, ln1_b, wqkv, wo, bo,              # per-layer (leading dim 1)
                ln2_g, ln2_b, w1, b1, w2, b2,            # per-layer (leading dim 1)
                lnf_g, lnf_b, w_lm, b_lm,                # shared final LN + LM head
                o_ref,                                   # (R, V) logits chunk
                x_scr):                                  # VMEM (R, C) activation carry
    l = pl.program_id(1)
    num_layers = pl.num_programs(1)

    # Load the chunk's embeddings into the VMEM-resident carry at the first layer.
    @pl.when(l == 0)
    def _():
        x_scr[...] = x_ref[...]

    x = x_scr[...]                                       # (R, C), R = bc * T
    R, C = x.shape
    T = seq_len
    bc = R // T
    hs = C // num_heads
    scale = float(hs) ** -0.5

    # ---- multi-head causal self-attention on ln1(x) ----
    h = _layernorm(x, ln1_g[0, 0], ln1_b[0, 0])
    qkv = jnp.dot(h, wqkv[0], preferred_element_type=jnp.float32)   # (R, 3C) fused QKV
    qb = qkv[:, 0 * C:1 * C].reshape(bc, T, C)
    kb = qkv[:, 1 * C:2 * C].reshape(bc, T, C)
    vb = qkv[:, 2 * C:3 * C].reshape(bc, T, C)

    row = jax.lax.broadcasted_iota(jnp.int32, (bc, T, T), 1)
    col = jax.lax.broadcasted_iota(jnp.int32, (bc, T, T), 2)
    causal = col <= row                                   # diagonal always allowed

    head_outs = []
    for hd in range(num_heads):                           # static unroll (nh small)
        sl = slice(hd * hs, (hd + 1) * hs)
        qh, kh, vh = qb[..., sl], kb[..., sl], vb[..., sl]           # (bc, T, hs)
        s = jnp.einsum('bqd,bkd->bqk', qh, kh,
                       preferred_element_type=jnp.float32) * scale   # (bc, T, T)
        s = jnp.where(causal, s, -jnp.inf)
        s = s - jnp.max(s, axis=-1, keepdims=True)
        p = jnp.exp(s)
        p = p * pl.reciprocal(jnp.sum(p, axis=-1, keepdims=True), approx=True)
        head_outs.append(jnp.einsum('bqk,bkd->bqd', p, vh,
                                    preferred_element_type=jnp.float32))
    sa = jnp.concatenate(head_outs, axis=-1).reshape(R, C)
    sa = jnp.dot(sa, wo[0], preferred_element_type=jnp.float32) + bo[0, 0]
    x = x + sa                                            # residual 1

    # ---- feed-forward (4x, ReLU) on ln2(x) ----
    h2 = _layernorm(x, ln2_g[0, 0], ln2_b[0, 0])
    ff = jnp.dot(h2, w1[0], preferred_element_type=jnp.float32) + b1[0, 0]
    ff = jnp.maximum(ff, 0.0)
    ff = jnp.dot(ff, w2[0], preferred_element_type=jnp.float32) + b2[0, 0]
    x = x + ff                                            # residual 2

    x_scr[...] = x                                        # carry to next layer

    # ---- final LayerNorm + LM head, only after the last layer ----
    @pl.when(l == num_layers - 1)
    def _():
        xf = _layernorm(x, lnf_g[0], lnf_b[0])
        o_ref[...] = jnp.dot(xf, w_lm[...],
                             preferred_element_type=jnp.float32) + b_lm[0]


# ----------------------------- forward wrapper ---------------------------------

def gpt_forward(params, tokens, num_heads, targets=None):
    B, T = tokens.shape
    C = params["tok_emb"].shape[1]
    V = params["w_lm"].shape[1]
    L = params["ln1_g"].shape[0]
    H = params["w1"].shape[2]

    # Embedding gathers are plain-JAX glue (dynamic gather has no clean tile form here).
    tok_emb = jnp.take(params["tok_emb"], tokens, axis=0)            # (B, T, C)
    pos_emb = params["pos_emb"][:T]                                  # (T, C)
    x = (tok_emb + pos_emb).astype(jnp.float32).reshape(B * T, C)    # (B*T, C)

    # Split the batch into at most two row-chunks: gives a "parallel" grid axis so
    # v7x's 2 TensorCores both get work, while keeping each block's row count as
    # large as possible for sublane utilization on v5e/v6e.
    bc = B // 2 if (B % 2 == 0 and B >= 2) else B
    nbc = B // bc
    R = bc * T

    def per_layer(shape):
        return pl.BlockSpec(shape, lambda b, l: (l,) + (0,) * (len(shape) - 1))

    def shared(shape):
        return pl.BlockSpec(shape, lambda b, l: (0,) * len(shape))

    in_specs = [
        pl.BlockSpec((R, C), lambda b, l: (b, 0)),            # x rows (chunked by batch)
        per_layer((1, 1, C)), per_layer((1, 1, C)),           # ln1 gamma/beta
        per_layer((1, C, 3 * C)),                             # fused Wqkv
        per_layer((1, C, C)), per_layer((1, 1, C)),           # Wo, bo
        per_layer((1, 1, C)), per_layer((1, 1, C)),           # ln2 gamma/beta
        per_layer((1, C, H)), per_layer((1, 1, H)),           # W1, b1
        per_layer((1, H, C)), per_layer((1, 1, C)),           # W2, b2
        shared((1, C)), shared((1, C)),                       # final LN gamma/beta
        shared((C, V)), shared((1, V)),                       # LM head W, b
    ]

    logits_flat = pl.pallas_call(
        functools.partial(_gpt_kernel, num_heads, T),
        out_shape=jax.ShapeDtypeStruct((B * T, V), jnp.float32),
        grid=(nbc, L),
        in_specs=in_specs,
        out_specs=pl.BlockSpec((R, V), lambda b, l: (b, 0)),
        scratch_shapes=[pltpu.VMEM((R, C), jnp.float32)],
        compiler_params=pltpu.CompilerParams(
            dimension_semantics=("parallel", "arbitrary")),
    )(x,
      params["ln1_g"], params["ln1_b"], params["wqkv"],
      params["wo"], params["bo"],
      params["ln2_g"], params["ln2_b"],
      params["w1"], params["b1"], params["w2"], params["b2"],
      params["lnf_g"], params["lnf_b"], params["w_lm"], params["b_lm"])

    logits = logits_flat.reshape(B, T, V)
    loss = None
    # TODO(synk): cross-entropy loss path (targets is not None) not implemented here.
    return logits, loss


# ----------------------------- parameter init ---------------------------------

def init_params(key, vocab, C, block_size, num_layers, num_heads):
    std = 0.02
    keys = iter(jax.random.split(key, 3 + 6 * num_layers))

    def normal(shape):
        return (std * jax.random.normal(next(keys), shape)).astype(jnp.float32)

    H = 4 * C
    ln1_g, ln1_b, wqkv, wo, bo = [], [], [], [], []
    ln2_g, ln2_b, w1, b1, w2, b2 = [], [], [], [], [], []
    for _ in range(num_layers):
        ln1_g.append(jnp.ones((1, C), jnp.float32))
        ln1_b.append(jnp.zeros((1, C), jnp.float32))
        wq, wk, wv = normal((C, C)), normal((C, C)), normal((C, C))
        wqkv.append(jnp.concatenate([wq, wk, wv], axis=-1))   # fused (C, 3C)
        wo.append(normal((C, C)))
        bo.append(jnp.zeros((1, C), jnp.float32))
        ln2_g.append(jnp.ones((1, C), jnp.float32))
        ln2_b.append(jnp.zeros((1, C), jnp.float32))
        w1.append(normal((C, H)))
        b1.append(jnp.zeros((1, H), jnp.float32))
        w2.append(normal((H, C)))
        b2.append(jnp.zeros((1, C), jnp.float32))

    stack = lambda xs: jnp.stack(xs, axis=0)
    return {
        "tok_emb": normal((vocab, C)),
        "pos_emb": normal((block_size, C)),
        "ln1_g": stack(ln1_g), "ln1_b": stack(ln1_b),
        "wqkv": stack(wqkv),
        "wo": stack(wo), "bo": stack(bo),
        "ln2_g": stack(ln2_g), "ln2_b": stack(ln2_b),
        "w1": stack(w1), "b1": stack(b1),
        "w2": stack(w2), "b2": stack(b2),
        "lnf_g": jnp.ones((1, C), jnp.float32),
        "lnf_b": jnp.zeros((1, C), jnp.float32),
        "w_lm": normal((C, vocab)),
        "b_lm": jnp.zeros((1, vocab), jnp.float32),
    }


# ----------------------------------- main --------------------------------------

if __name__ == "__main__":
    VOCAB = 128
    EMB = 32          # embeddingDimensions
    BLOCK = 8         # blockSize (= T)
    LAYERS = 2        # numLayers
    HEADS = 4         # numHeads
    BATCH = 2         # batchSize

    key = jax.random.PRNGKey(0)
    pkey, ikey = jax.random.split(key)
    params = init_params(pkey, VOCAB, EMB, BLOCK, LAYERS, HEADS)
    tokens = jax.random.randint(ikey, (BATCH, BLOCK), 0, VOCAB, dtype=jnp.int32)

    logits, loss = gpt_forward(params, tokens, HEADS, targets=None)
    logits = jax.block_until_ready(logits)
    assert logits.shape == (BATCH, BLOCK, VOCAB)
    assert loss is None
    print("KERNEL_OK")
</pallas_src>

<mosaic_0001>
module attributes {stable_mosaic.version = 11 : i64} {
  func.func @_gpt_kernel(%arg0: i32, %arg1: i32, %arg2: memref<8x32xf32, #tpu.memory_space<vmem>>, %arg3: memref<1x1x32xf32, #tpu.memory_space<vmem>>, %arg4: memref<1x1x32xf32, #tpu.memory_space<vmem>>, %arg5: memref<1x32x96xf32, #tpu.memory_space<vmem>>, %arg6: memref<1x32x32xf32, #tpu.memory_space<vmem>>, %arg7: memref<1x1x32xf32, #tpu.memory_space<vmem>>, %arg8: memref<1x1x32xf32, #tpu.memory_space<vmem>>, %arg9: memref<1x1x32xf32, #tpu.memory_space<vmem>>, %arg10: memref<1x32x128xf32, #tpu.memory_space<vmem>>, %arg11: memref<1x1x128xf32, #tpu.memory_space<vmem>>, %arg12: memref<1x128x32xf32, #tpu.memory_space<vmem>>, %arg13: memref<1x1x32xf32, #tpu.memory_space<vmem>>, %arg14: memref<1x32xf32, #tpu.memory_space<vmem>>, %arg15: memref<1x32xf32, #tpu.memory_space<vmem>>, %arg16: memref<32x128xf32, #tpu.memory_space<vmem>>, %arg17: memref<1x128xf32, #tpu.memory_space<vmem>>, %arg18: memref<8x128xf32, #tpu.memory_space<vmem>>, %arg19: memref<8x32xf32, #tpu.memory_space<vmem>>) attributes {dimension_semantics = [#tpu.dimension_semantics<parallel>, #tpu.dimension_semantics<arbitrary>], iteration_bounds = array<i64: 2, 2>, scalar_prefetch = 0 : i64, scratch_operands = 1 : i64, tpu.core_type = #tpu.core_type<tc>, window_params = [{transform_indices = @transform_0, window_bounds = array<i64: 8, 32>}, {transform_indices = @transform_1, window_bounds = array<i64: 1, 1, 32>}, {transform_indices = @transform_2, window_bounds = array<i64: 1, 1, 32>}, {transform_indices = @transform_3, window_bounds = array<i64: 1, 32, 96>}, {transform_indices = @transform_4, window_bounds = array<i64: 1, 32, 32>}, {transform_indices = @transform_5, window_bounds = array<i64: 1, 1, 32>}, {transform_indices = @transform_6, window_bounds = array<i64: 1, 1, 32>}, {transform_indices = @transform_7, window_bounds = array<i64: 1, 1, 32>}, {transform_indices = @transform_8, window_bounds = array<i64: 1, 32, 128>}, {transform_indices = @transform_9, window_bounds = array<i64: 1, 1, 128>}, {transform_indices = @transform_10, window_bounds = array<i64: 1, 128, 32>}, {transform_indices = @transform_11, window_bounds = array<i64: 1, 1, 32>}, {pipeline_mode = #tpu.pipeline_mode<synchronous>, transform_indices = @transform_12, window_bounds = array<i64: 1, 32>}, {pipeline_mode = #tpu.pipeline_mode<synchronous>, transform_indices = @transform_13, window_bounds = array<i64: 1, 32>}, {pipeline_mode = #tpu.pipeline_mode<synchronous>, transform_indices = @transform_14, window_bounds = array<i64: 32, 128>}, {pipeline_mode = #tpu.pipeline_mode<synchronous>, transform_indices = @transform_15, window_bounds = array<i64: 1, 128>}, {transform_indices = @transform_16, window_bounds = array<i64: 8, 128>}]} {
    %c0_i32 = arith.constant 0 : i32
    %0 = arith.cmpi eq, %arg1, %c0_i32 : i32
    %1 = arith.extui %0 : i1 to i32
    %c0_i32_0 = arith.constant 0 : i32
    %2 = arith.cmpi ne, %1, %c0_i32_0 : i32
    scf.if %2 {
      %c0_76 = arith.constant 0 : index
      %c0_77 = arith.constant 0 : index
      %182 = vector.load %arg2[%c0_76, %c0_77] : memref<8x32xf32, #tpu.memory_space<vmem>>, vector<8x32xf32>
      %c0_78 = arith.constant 0 : index
      %c0_79 = arith.constant 0 : index
      %183 = vector.load %arg19[%c0_78, %c0_79] : memref<8x32xf32, #tpu.memory_space<vmem>>, vector<8x32xf32>
      tpu.vector_store %arg19[%c0_78, %c0_79], %182 {strides = array<i32>} : memref<8x32xf32, #tpu.memory_space<vmem>>, vector<8x32xf32>,
    } else {
    }
    %c0 = arith.constant 0 : index
    %c0_1 = arith.constant 0 : index
    %3 = vector.load %arg19[%c0, %c0_1] : memref<8x32xf32, #tpu.memory_space<vmem>>, vector<8x32xf32>
    %c0_2 = arith.constant 0 : index
    %c0_3 = arith.constant 0 : index
    %c0_4 = arith.constant 0 : index
    %4 = vector.load %arg3[%c0_2, %c0_3, %c0_4] : memref<1x1x32xf32, #tpu.memory_space<vmem>>, vector<1x1x32xf32>
    %5 = vector.shape_cast %4 : vector<1x1x32xf32> to vector<32xf32>
    %c0_5 = arith.constant 0 : index
    %c0_6 = arith.constant 0 : index
    %c0_7 = arith.constant 0 : index
    %6 = vector.load %arg4[%c0_5, %c0_6, %c0_7] : memref<1x1x32xf32, #tpu.memory_space<vmem>>, vector<1x1x32xf32>
    %7 = vector.shape_cast %6 : vector<1x1x32xf32> to vector<32xf32>
    %cst = arith.constant dense<0.000000e+00> : vector<8xf32>
    %8 = vector.multi_reduction <add>, %3, %cst [1] : vector<8x32xf32> to vector<8xf32>
    %9 = vector.shape_cast %8 : vector<8xf32> to vector<8x1xf32>
    %cst_8 = arith.constant 3.200000e+01 : f32
    %10 = vector.broadcast %cst_8 : f32 to vector<8x1xf32>
    %11 = arith.divf %9, %10 : vector<8x1xf32>
    %12 = vector.broadcast %11 : vector<8x1xf32> to vector<8x32xf32>
    %13 = arith.subf %3, %12 : vector<8x32xf32>
    %14 = arith.mulf %13, %13 : vector<8x32xf32>
    %cst_9 = arith.constant dense<0.000000e+00> : vector<8xf32>
    %15 = vector.multi_reduction <add>, %14, %cst_9 [1] : vector<8x32xf32> to vector<8xf32>
    %16 = vector.shape_cast %15 : vector<8xf32> to vector<8x1xf32>
    %cst_10 = arith.constant 3.200000e+01 : f32
    %17 = vector.broadcast %cst_10 : f32 to vector<8x1xf32>
    %18 = arith.divf %16, %17 : vector<8x1xf32>
    %19 = vector.broadcast %11 : vector<8x1xf32> to vector<8x32xf32>
    %20 = arith.subf %3, %19 : vector<8x32xf32>
    %cst_11 = arith.constant 9.99999974E-6 : f32
    %21 = vector.broadcast %cst_11 : f32 to vector<8x1xf32>
    %22 = arith.addf %18, %21 : vector<8x1xf32>
    %23 = math.rsqrt %22 : vector<8x1xf32>
    %24 = vector.broadcast %23 : vector<8x1xf32> to vector<8x32xf32>
    %25 = arith.mulf %20, %24 : vector<8x32xf32>
    %26 = vector.shape_cast %5 : vector<32xf32> to vector<1x32xf32>
    %27 = vector.broadcast %26 : vector<1x32xf32> to vector<8x32xf32>
    %28 = arith.mulf %25, %27 : vector<8x32xf32>
    %29 = vector.shape_cast %7 : vector<32xf32> to vector<1x32xf32>
    %30 = vector.broadcast %29 : vector<1x32xf32> to vector<8x32xf32>
    %31 = arith.addf %28, %30 : vector<8x32xf32>
    %c0_12 = arith.constant 0 : index
    %c0_13 = arith.constant 0 : index
    %c0_14 = arith.constant 0 : index
    %32 = vector.load %arg5[%c0_12, %c0_13, %c0_14] : memref<1x32x96xf32, #tpu.memory_space<vmem>>, vector<1x32x96xf32>
    %33 = vector.shape_cast %32 : vector<1x32x96xf32> to vector<32x96xf32>
    %cst_15 = arith.constant dense<0.000000e+00> : vector<8x96xf32>
    %34 = tpu.matmul %31, %33, %cst_15 {dimension_numbers = #tpu.dot_dimension_numbers<[1], [0], [0], [1], [0, 0, 1, 1], [], []>} : vector<8x32xf32>, vector<32x96xf32>, vector<8x96xf32> -> vector<8x96xf32>
    %35 = vector.extract_strided_slice %34 {offsets = [0, 0], sizes = [8, 32], strides = [1, 1]} : vector<8x96xf32> to vector<8x32xf32>
    %36 = vector.shape_cast %35 : vector<8x32xf32> to vector<1x8x32xf32>
    %37 = vector.extract_strided_slice %34 {offsets = [0, 32], sizes = [8, 32], strides = [1, 1]} : vector<8x96xf32> to vector<8x32xf32>
    %38 = vector.shape_cast %37 : vector<8x32xf32> to vector<1x8x32xf32>
    %39 = vector.extract_strided_slice %34 {offsets = [0, 64], sizes = [8, 32], strides = [1, 1]} : vector<8x96xf32> to vector<8x32xf32>
    %40 = vector.shape_cast %39 : vector<8x32xf32> to vector<1x8x32xf32>
    %41 = tpu.iota {dimensions = array<i32: 1>} : vector<1x8x8xi32>
    %42 = tpu.iota {dimensions = array<i32: 2>} : vector<1x8x8xi32>
    %43 = arith.cmpi sle, %42, %41 : vector<1x8x8xi32>
    %44 = vector.extract_strided_slice %36 {offsets = [0, 0, 0], sizes = [1, 8, 8], strides = [1, 1, 1]} : vector<1x8x32xf32> to vector<1x8x8xf32>
    %45 = vector.extract_strided_slice %38 {offsets = [0, 0, 0], sizes = [1, 8, 8], strides = [1, 1, 1]} : vector<1x8x32xf32> to vector<1x8x8xf32>
    %46 = vector.extract_strided_slice %40 {offsets = [0, 0, 0], sizes = [1, 8, 8], strides = [1, 1, 1]} : vector<1x8x32xf32> to vector<1x8x8xf32>
    "tpu.trace_start"() <{level = 10 : i32, message = "bqd,bkd->bqk"}> : () -> ()
    %cst_16 = arith.constant dense<0.000000e+00> : vector<1x8x8xf32>
    %47 = tpu.matmul %44, %45, %cst_16 {dimension_numbers = #tpu.dot_dimension_numbers<[2], [2], [1], [1], [0, 0, 0, 1, 1, 1], [0], [0]>} : vector<1x8x8xf32>, vector<1x8x8xf32>, vector<1x8x8xf32> -> vector<1x8x8xf32>
    "tpu.trace_stop"() : () -> ()
    %cst_17 = arith.constant 0.353553385 : f32
    %48 = vector.broadcast %cst_17 : f32 to vector<1x8x8xf32>
    %49 = arith.mulf %47, %48 : vector<1x8x8xf32>
    %cst_18 = arith.constant 0xFF800000 : f32
    %50 = vector.broadcast %cst_18 : f32 to vector<1x8x8xf32>
    %51 = arith.select %43, %49, %50 : vector<1x8x8xi1>, vector<1x8x8xf32>
    %cst_19 = arith.constant dense<0xFF800000> : vector<1x8xf32>
    %52 = vector.multi_reduction <maximumf>, %51, %cst_19 [2] : vector<1x8x8xf32> to vector<1x8xf32>
    %53 = vector.shape_cast %52 : vector<1x8xf32> to vector<1x8x1xf32>
    %54 = vector.broadcast %53 : vector<1x8x1xf32> to vector<1x8x8xf32>
    %55 = arith.subf %51, %54 : vector<1x8x8xf32>
    %56 = math.exp %55 : vector<1x8x8xf32>
    %cst_20 = arith.constant dense<0.000000e+00> : vector<1x8xf32>
    %57 = vector.multi_reduction <add>, %56, %cst_20 [2] : vector<1x8x8xf32> to vector<1x8xf32>
    %58 = vector.shape_cast %57 : vector<1x8xf32> to vector<1x8x1xf32>
    %59 = tpu.reciprocal %58 {approx = true} : vector<1x8x1xf32> -> vector<1x8x1xf32>
    %60 = vector.broadcast %59 : vector<1x8x1xf32> to vector<1x8x8xf32>
    %61 = arith.mulf %56, %60 : vector<1x8x8xf32>
    "tpu.trace_start"() <{level = 10 : i32, message = "bqk,bkd->bqd"}> : () -> ()
    %cst_21 = arith.constant dense<0.000000e+00> : vector<1x8x8xf32>
    %62 = tpu.matmul %61, %46, %cst_21 {dimension_numbers = #tpu.dot_dimension_numbers<[2], [1], [1], [2], [0, 0, 0, 1, 1, 2], [0], [0]>} : vector<1x8x8xf32>, vector<1x8x8xf32>, vector<1x8x8xf32> -> vector<1x8x8xf32>
    "tpu.trace_stop"() : () -> ()
    %63 = vector.extract_strided_slice %36 {offsets = [0, 0, 8], sizes = [1, 8, 8], strides = [1, 1, 1]} : vector<1x8x32xf32> to vector<1x8x8xf32>
    %64 = vector.extract_strided_slice %38 {offsets = [0, 0, 8], sizes = [1, 8, 8], strides = [1, 1, 1]} : vector<1x8x32xf32> to vector<1x8x8xf32>
    %65 = vector.extract_strided_slice %40 {offsets = [0, 0, 8], sizes = [1, 8, 8], strides = [1, 1, 1]} : vector<1x8x32xf32> to vector<1x8x8xf32>
    "tpu.trace_start"() <{level = 10 : i32, message = "bqd,bkd->bqk"}> : () -> ()
    %cst_22 = arith.constant dense<0.000000e+00> : vector<1x8x8xf32>
    %66 = tpu.matmul %63, %64, %cst_22 {dimension_numbers = #tpu.dot_dimension_numbers<[2], [2], [1], [1], [0, 0, 0, 1, 1, 1], [0], [0]>} : vector<1x8x8xf32>, vector<1x8x8xf32>, vector<1x8x8xf32> -> vector<1x8x8xf32>
    "tpu.trace_stop"() : () -> ()
    %cst_23 = arith.constant 0.353553385 : f32
    %67 = vector.broadcast %cst_23 : f32 to vector<1x8x8xf32>
    %68 = arith.mulf %66, %67 : vector<1x8x8xf32>
    %cst_24 = arith.constant 0xFF800000 : f32
    %69 = vector.broadcast %cst_24 : f32 to vector<1x8x8xf32>
    %70 = arith.select %43, %68, %69 : vector<1x8x8xi1>, vector<1x8x8xf32>
    %cst_25 = arith.constant dense<0xFF800000> : vector<1x8xf32>
    %71 = vector.multi_reduction <maximumf>, %70, %cst_25 [2] : vector<1x8x8xf32> to vector<1x8xf32>
    %72 = vector.shape_cast %71 : vector<1x8xf32> to vector<1x8x1xf32>
    %73 = vector.broadcast %72 : vector<1x8x1xf32> to vector<1x8x8xf32>
    %74 = arith.subf %70, %73 : vector<1x8x8xf32>
    %75 = math.exp %74 : vector<1x8x8xf32>
    %cst_26 = arith.constant dense<0.000000e+00> : vector<1x8xf32>
    %76 = vector.multi_reduction <add>, %75, %cst_26 [2] : vector<1x8x8xf32> to vector<1x8xf32>
    %77 = vector.shape_cast %76 : vector<1x8xf32> to vector<1x8x1xf32>
    %78 = tpu.reciprocal %77 {approx = true} : vector<1x8x1xf32> -> vector<1x8x1xf32>
    %79 = vector.broadcast %78 : vector<1x8x1xf32> to vector<1x8x8xf32>
    %80 = arith.mulf %75, %79 : vector<1x8x8xf32>
    "tpu.trace_start"() <{level = 10 : i32, message = "bqk,bkd->bqd"}> : () -> ()
    %cst_27 = arith.constant dense<0.000000e+00> : vector<1x8x8xf32>
    %81 = tpu.matmul %80, %65, %cst_27 {dimension_numbers = #tpu.dot_dimension_numbers<[2], [1], [1], [2], [0, 0, 0, 1, 1, 2], [0], [0]>} : vector<1x8x8xf32>, vector<1x8x8xf32>, vector<1x8x8xf32> -> vector<1x8x8xf32>
    "tpu.trace_stop"() : () -> ()
    %82 = vector.extract_strided_slice %36 {offsets = [0, 0, 16], sizes = [1, 8, 8], strides = [1, 1, 1]} : vector<1x8x32xf32> to vector<1x8x8xf32>
    %83 = vector.extract_strided_slice %38 {offsets = [0, 0, 16], sizes = [1, 8, 8], strides = [1, 1, 1]} : vector<1x8x32xf32> to vector<1x8x8xf32>
    %84 = vector.extract_strided_slice %40 {offsets = [0, 0, 16], sizes = [1, 8, 8], strides = [1, 1, 1]} : vector<1x8x32xf32> to vector<1x8x8xf32>
    "tpu.trace_start"() <{level = 10 : i32, message = "bqd,bkd->bqk"}> : () -> ()
    %cst_28 = arith.constant dense<0.000000e+00> : vector<1x8x8xf32>
    %85 = tpu.matmul %82, %83, %cst_28 {dimension_numbers = #tpu.dot_dimension_numbers<[2], [2], [1], [1], [0, 0, 0, 1, 1, 1], [0], [0]>} : vector<1x8x8xf32>, vector<1x8x8xf32>, vector<1x8x8xf32> -> vector<1x8x8xf32>
    "tpu.trace_stop"() : () -> ()
    %cst_29 = arith.constant 0.353553385 : f32
    %86 = vector.broadcast %cst_29 : f32 to vector<1x8x8xf32>
    %87 = arith.mulf %85, %86 : vector<1x8x8xf32>
    %cst_30 = arith.constant 0xFF800000 : f32
    %88 = vector.broadcast %cst_30 : f32 to vector<1x8x8xf32>
    %89 = arith.select %43, %87, %88 : vector<1x8x8xi1>, vector<1x8x8xf32>
    %cst_31 = arith.constant dense<0xFF800000> : vector<1x8xf32>
    %90 = vector.multi_reduction <maximumf>, %89, %cst_31 [2] : vector<1x8x8xf32> to vector<1x8xf32>
    %91 = vector.shape_cast %90 : vector<1x8xf32> to vector<1x8x1xf32>
    %92 = vector.broadcast %91 : vector<1x8x1xf32> to vector<1x8x8xf32>
    %93 = arith.subf %89, %92 : vector<1x8x8xf32>
    %94 = math.exp %93 : vector<1x8x8xf32>
    %cst_32 = arith.constant dense<0.000000e+00> : vector<1x8xf32>
    %95 = vector.multi_reduction <add>, %94, %cst_32 [2] : vector<1x8x8xf32> to vector<1x8xf32>
    %96 = vector.shape_cast %95 : vector<1x8xf32> to vector<1x8x1xf32>
    %97 = tpu.reciprocal %96 {approx = true} : vector<1x8x1xf32> -> vector<1x8x1xf32>
    %98 = vector.broadcast %97 : vector<1x8x1xf32> to vector<1x8x8xf32>
    %99 = arith.mulf %94, %98 : vector<1x8x8xf32>
    "tpu.trace_start"() <{level = 10 : i32, message = "bqk,bkd->bqd"}> : () -> ()
    %cst_33 = arith.constant dense<0.000000e+00> : vector<1x8x8xf32>
    %100 = tpu.matmul %99, %84, %cst_33 {dimension_numbers = #tpu.dot_dimension_numbers<[2], [1], [1], [2], [0, 0, 0, 1, 1, 2], [0], [0]>} : vector<1x8x8xf32>, vector<1x8x8xf32>, vector<1x8x8xf32> -> vector<1x8x8xf32>
    "tpu.trace_stop"() : () -> ()
    %101 = vector.extract_strided_slice %36 {offsets = [0, 0, 24], sizes = [1, 8, 8], strides = [1, 1, 1]} : vector<1x8x32xf32> to vector<1x8x8xf32>
    %102 = vector.extract_strided_slice %38 {offsets = [0, 0, 24], sizes = [1, 8, 8], strides = [1, 1, 1]} : vector<1x8x32xf32> to vector<1x8x8xf32>
    %103 = vector.extract_strided_slice %40 {offsets = [0, 0, 24], sizes = [1, 8, 8], strides = [1, 1, 1]} : vector<1x8x32xf32> to vector<1x8x8xf32>
    "tpu.trace_start"() <{level = 10 : i32, message = "bqd,bkd->bqk"}> : () -> ()
    %cst_34 = arith.constant dense<0.000000e+00> : vector<1x8x8xf32>
    %104 = tpu.matmul %101, %102, %cst_34 {dimension_numbers = #tpu.dot_dimension_numbers<[2], [2], [1], [1], [0, 0, 0, 1, 1, 1], [0], [0]>} : vector<1x8x8xf32>, vector<1x8x8xf32>, vector<1x8x8xf32> -> vector<1x8x8xf32>
    "tpu.trace_stop"() : () -> ()
    %cst_35 = arith.constant 0.353553385 : f32
    %105 = vector.broadcast %cst_35 : f32 to vector<1x8x8xf32>
    %106 = arith.mulf %104, %105 : vector<1x8x8xf32>
    %cst_36 = arith.constant 0xFF800000 : f32
    %107 = vector.broadcast %cst_36 : f32 to vector<1x8x8xf32>
    %108 = arith.select %43, %106, %107 : vector<1x8x8xi1>, vector<1x8x8xf32>
    %cst_37 = arith.constant dense<0xFF800000> : vector<1x8xf32>
    %109 = vector.multi_reduction <maximumf>, %108, %cst_37 [2] : vector<1x8x8xf32> to vector<1x8xf32>
    %110 = vector.shape_cast %109 : vector<1x8xf32> to vector<1x8x1xf32>
    %111 = vector.broadcast %110 : vector<1x8x1xf32> to vector<1x8x8xf32>
    %112 = arith.subf %108, %111 : vector<1x8x8xf32>
    %113 = math.exp %112 : vector<1x8x8xf32>
    %cst_38 = arith.constant dense<0.000000e+00> : vector<1x8xf32>
    %114 = vector.multi_reduction <add>, %113, %cst_38 [2] : vector<1x8x8xf32> to vector<1x8xf32>
    %115 = vector.shape_cast %114 : vector<1x8xf32> to vector<1x8x1xf32>
    %116 = tpu.reciprocal %115 {approx = true} : vector<1x8x1xf32> -> vector<1x8x1xf32>
    %117 = vector.broadcast %116 : vector<1x8x1xf32> to vector<1x8x8xf32>
    %118 = arith.mulf %113, %117 : vector<1x8x8xf32>
    "tpu.trace_start"() <{level = 10 : i32, message = "bqk,bkd->bqd"}> : () -> ()
    %cst_39 = arith.constant dense<0.000000e+00> : vector<1x8x8xf32>
    %119 = tpu.matmul %118, %103, %cst_39 {dimension_numbers = #tpu.dot_dimension_numbers<[2], [1], [1], [2], [0, 0, 0, 1, 1, 2], [0], [0]>} : vector<1x8x8xf32>, vector<1x8x8xf32>, vector<1x8x8xf32> -> vector<1x8x8xf32>
    "tpu.trace_stop"() : () -> ()
    %120 = tpu.concatenate %62, %81, %100, %119 in 2 : vector<1x8x8xf32>, vector<1x8x8xf32>, vector<1x8x8xf32>, vector<1x8x8xf32> -> vector<1x8x32xf32>
    %121 = vector.shape_cast %120 : vector<1x8x32xf32> to vector<8x32xf32>
    %c0_40 = arith.constant 0 : index
    %c0_41 = arith.constant 0 : index
    %c0_42 = arith.constant 0 : index
    %122 = vector.load %arg6[%c0_40, %c0_41, %c0_42] : memref<1x32x32xf32, #tpu.memory_space<vmem>>, vector<1x32x32xf32>
    %123 = vector.shape_cast %122 : vector<1x32x32xf32> to vector<32x32xf32>
    %cst_43 = arith.constant dense<0.000000e+00> : vector<8x32xf32>
    %124 = tpu.matmul %121, %123, %cst_43 {dimension_numbers = #tpu.dot_dimension_numbers<[1], [0], [0], [1], [0, 0, 1, 1], [], []>} : vector<8x32xf32>, vector<32x32xf32>, vector<8x32xf32> -> vector<8x32xf32>
    %c0_44 = arith.constant 0 : index
    %c0_45 = arith.constant 0 : index
    %c0_46 = arith.constant 0 : index
    %125 = vector.load %arg7[%c0_44, %c0_45, %c0_46] : memref<1x1x32xf32, #tpu.memory_space<vmem>>, vector<1x1x32xf32>
    %126 = vector.shape_cast %125 : vector<1x1x32xf32> to vector<32xf32>
    %127 = vector.shape_cast %126 : vector<32xf32> to vector<1x32xf32>
    %128 = vector.broadcast %127 : vector<1x32xf32> to vector<8x32xf32>
    %129 = arith.addf %124, %128 : vector<8x32xf32>
    %130 = arith.addf %3, %129 : vector<8x32xf32>
    %c0_47 = arith.constant 0 : index
    %c0_48 = arith.constant 0 : index
    %c0_49 = arith.constant 0 : index
    %131 = vector.load %arg8[%c0_47, %c0_48, %c0_49] : memref<1x1x32xf32, #tpu.memory_space<vmem>>, vector<1x1x32xf32>
    %132 = vector.shape_cast %131 : vector<1x1x32xf32> to vector<32xf32>
    %c0_50 = arith.constant 0 : index
    %c0_51 = arith.constant 0 : index
    %c0_52 = arith.constant 0 : index
    %133 = vector.load %arg9[%c0_50, %c0_51, %c0_52] : memref<1x1x32xf32, #tpu.memory_space<vmem>>, vector<1x1x32xf32>
    %134 = vector.shape_cast %133 : vector<1x1x32xf32> to vector<32xf32>
    %cst_53 = arith.constant dense<0.000000e+00> : vector<8xf32>
    %135 = vector.multi_reduction <add>, %130, %cst_53 [1] : vector<8x32xf32> to vector<8xf32>
    %136 = vector.shape_cast %135 : vector<8xf32> to vector<8x1xf32>
    %cst_54 = arith.constant 3.200000e+01 : f32
    %137 = vector.broadcast %cst_54 : f32 to vector<8x1xf32>
    %138 = arith.divf %136, %137 : vector<8x1xf32>
    %139 = vector.broadcast %138 : vector<8x1xf32> to vector<8x32xf32>
    %140 = arith.subf %130, %139 : vector<8x32xf32>
    %141 = arith.mulf %140, %140 : vector<8x32xf32>
    %cst_55 = arith.constant dense<0.000000e+00> : vector<8xf32>
    %142 = vector.multi_reduction <add>, %141, %cst_55 [1] : vector<8x32xf32> to vector<8xf32>
    %143 = vector.shape_cast %142 : vector<8xf32> to vector<8x1xf32>
    %cst_56 = arith.constant 3.200000e+01 : f32
    %144 = vector.broadcast %cst_56 : f32 to vector<8x1xf32>
    %145 = arith.divf %143, %144 : vector<8x1xf32>
    %146 = vector.broadcast %138 : vector<8x1xf32> to vector<8x32xf32>
    %147 = arith.subf %130, %146 : vector<8x32xf32>
    %cst_57 = arith.constant 9.99999974E-6 : f32
    %148 = vector.broadcast %cst_57 : f32 to vector<8x1xf32>
    %149 = arith.addf %145, %148 : vector<8x1xf32>
    %150 = math.rsqrt %149 : vector<8x1xf32>
    %151 = vector.broadcast %150 : vector<8x1xf32> to vector<8x32xf32>
    %152 = arith.mulf %147, %151 : vector<8x32xf32>
    %153 = vector.shape_cast %132 : vector<32xf32> to vector<1x32xf32>
    %154 = vector.broadcast %153 : vector<1x32xf32> to vector<8x32xf32>
    %155 = arith.mulf %152, %154 : vector<8x32xf32>
    %156 = vector.shape_cast %134 : vector<32xf32> to vector<1x32xf32>
    %157 = vector.broadcast %156 : vector<1x32xf32> to vector<8x32xf32>
    %158 = arith.addf %155, %157 : vector<8x32xf32>
    %c0_58 = arith.constant 0 : index
    %c0_59 = arith.constant 0 : index
    %c0_60 = arith.constant 0 : index
    %159 = vector.load %arg10[%c0_58, %c0_59, %c0_60] : memref<1x32x128xf32, #tpu.memory_space<vmem>>, vector<1x32x128xf32>
    %160 = vector.shape_cast %159 : vector<1x32x128xf32> to vector<32x128xf32>
    %cst_61 = arith.constant dense<0.000000e+00> : vector<8x128xf32>
    %161 = tpu.matmul %158, %160, %cst_61 {dimension_numbers = #tpu.dot_dimension_numbers<[1], [0], [0], [1], [0, 0, 1, 1], [], []>} : vector<8x32xf32>, vector<32x128xf32>, vector<8x128xf32> -> vector<8x128xf32>
    %c0_62 = arith.constant 0 : index
    %c0_63 = arith.constant 0 : index
    %c0_64 = arith.constant 0 : index
    %162 = vector.load %arg11[%c0_62, %c0_63, %c0_64] : memref<1x1x128xf32, #tpu.memory_space<vmem>>, vector<1x1x128xf32>
    %163 = vector.shape_cast %162 : vector<1x1x128xf32> to vector<128xf32>
    %164 = vector.shape_cast %163 : vector<128xf32> to vector<1x128xf32>
    %165 = vector.broadcast %164 : vector<1x128xf32> to vector<8x128xf32>
    %166 = arith.addf %161, %165 : vector<8x128xf32>
    %cst_65 = arith.constant 0.000000e+00 : f32
    %167 = vector.broadcast %cst_65 : f32 to vector<8x128xf32>
    %168 = arith.maximumf %166, %167 : vector<8x128xf32>
    %c0_66 = arith.constant 0 : index
    %c0_67 = arith.constant 0 : index
    %c0_68 = arith.constant 0 : index
    %169 = vector.load %arg12[%c0_66, %c0_67, %c0_68] : memref<1x128x32xf32, #tpu.memory_space<vmem>>, vector<1x128x32xf32>
    %170 = vector.shape_cast %169 : vector<1x128x32xf32> to vector<128x32xf32>
    %cst_69 = arith.constant dense<0.000000e+00> : vector<8x32xf32>
    %171 = tpu.matmul %168, %170, %cst_69 {dimension_numbers = #tpu.dot_dimension_numbers<[1], [0], [0], [1], [0, 0, 1, 1], [], []>} : vector<8x128xf32>, vector<128x32xf32>, vector<8x32xf32> -> vector<8x32xf32>
    %c0_70 = arith.constant 0 : index
    %c0_71 = arith.constant 0 : index
    %c0_72 = arith.constant 0 : index
    %172 = vector.load %arg13[%c0_70, %c0_71, %c0_72] : memref<1x1x32xf32, #tpu.memory_space<vmem>>, vector<1x1x32xf32>
    %173 = vector.shape_cast %172 : vector<1x1x32xf32> to vector<32xf32>
    %174 = vector.shape_cast %173 : vector<32xf32> to vector<1x32xf32>
    %175 = vector.broadcast %174 : vector<1x32xf32> to vector<8x32xf32>
    %176 = arith.addf %171, %175 : vector<8x32xf32>
    %177 = arith.addf %130, %176 : vector<8x32xf32>
    %c0_73 = arith.constant 0 : index
    %c0_74 = arith.constant 0 : index
    %178 = vector.load %arg19[%c0_73, %c0_74] : memref<8x32xf32, #tpu.memory_space<vmem>>, vector<8x32xf32>
    tpu.vector_store %arg19[%c0_73, %c0_74], %177 {strides = array<i32>} : memref<8x32xf32, #tpu.memory_space<vmem>>, vector<8x32xf32>,
    %c1_i32 = arith.constant 1 : i32
    %179 = arith.cmpi eq, %arg1, %c1_i32 : i32
    %180 = arith.extui %179 : i1 to i32
    %c0_i32_75 = arith.constant 0 : i32
    %181 = arith.cmpi ne, %180, %c0_i32_75 : i32
    scf.if %181 {
      %c0_76 = arith.constant 0 : index
      %c0_77 = arith.constant 0 : index
      %182 = vector.load %arg14[%c0_76, %c0_77] : memref<1x32xf32, #tpu.memory_space<vmem>>, vector<1x32xf32>
      %183 = vector.shape_cast %182 : vector<1x32xf32> to vector<32xf32>
      %c0_78 = arith.constant 0 : index
      %c0_79 = arith.constant 0 : index
      %184 = vector.load %arg15[%c0_78, %c0_79] : memref<1x32xf32, #tpu.memory_space<vmem>>, vector<1x32xf32>
      %185 = vector.shape_cast %184 : vector<1x32xf32> to vector<32xf32>
      %cst_80 = arith.constant dense<0.000000e+00> : vector<8xf32>
      %186 = vector.multi_reduction <add>, %177, %cst_80 [1] : vector<8x32xf32> to vector<8xf32>
      %187 = vector.shape_cast %186 : vector<8xf32> to vector<8x1xf32>
      %cst_81 = arith.constant 3.200000e+01 : f32
      %188 = vector.broadcast %cst_81 : f32 to vector<8x1xf32>
      %189 = arith.divf %187, %188 : vector<8x1xf32>
      %190 = vector.broadcast %189 : vector<8x1xf32> to vector<8x32xf32>
      %191 = arith.subf %177, %190 : vector<8x32xf32>
      %192 = arith.mulf %191, %191 : vector<8x32xf32>
      %cst_82 = arith.constant dense<0.000000e+00> : vector<8xf32>
      %193 = vector.multi_reduction <add>, %192, %cst_82 [1] : vector<8x32xf32> to vector<8xf32>
      %194 = vector.shape_cast %193 : vector<8xf32> to vector<8x1xf32>
      %cst_83 = arith.constant 3.200000e+01 : f32
      %195 = vector.broadcast %cst_83 : f32 to vector<8x1xf32>
      %196 = arith.divf %194, %195 : vector<8x1xf32>
      %197 = vector.broadcast %189 : vector<8x1xf32> to vector<8x32xf32>
      %198 = arith.subf %177, %197 : vector<8x32xf32>
      %cst_84 = arith.constant 9.99999974E-6 : f32
      %199 = vector.broadcast %cst_84 : f32 to vector<8x1xf32>
      %200 = arith.addf %196, %199 : vector<8x1xf32>
      %201 = math.rsqrt %200 : vector<8x1xf32>
      %202 = vector.broadcast %201 : vector<8x1xf32> to vector<8x32xf32>
      %203 = arith.mulf %198, %202 : vector<8x32xf32>
      %204 = vector.shape_cast %183 : vector<32xf32> to vector<1x32xf32>
      %205 = vector.broadcast %204 : vector<1x32xf32> to vector<8x32xf32>
      %206 = arith.mulf %203, %205 : vector<8x32xf32>
      %207 = vector.shape_cast %185 : vector<32xf32> to vector<1x32xf32>
      %208 = vector.broadcast %207 : vector<1x32xf32> to vector<8x32xf32>
      %209 = arith.addf %206, %208 : vector<8x32xf32>
      %c0_85 = arith.constant 0 : index
      %c0_86 = arith.constant 0 : index
      %210 = vector.load %arg16[%c0_85, %c0_86] : memref<32x128xf32, #tpu.memory_space<vmem>>, vector<32x128xf32>
      %cst_87 = arith.constant dense<0.000000e+00> : vector<8x128xf32>
      %211 = tpu.matmul %209, %210, %cst_87 {dimension_numbers = #tpu.dot_dimension_numbers<[1], [0], [0], [1], [0, 0, 1, 1], [], []>} : vector<8x32xf32>, vector<32x128xf32>, vector<8x128xf32> -> vector<8x128xf32>
      %c0_88 = arith.constant 0 : index
      %c0_89 = arith.constant 0 : index
      %212 = vector.load %arg17[%c0_88, %c0_89] : memref<1x128xf32, #tpu.memory_space<vmem>>, vector<1x128xf32>
      %213 = vector.shape_cast %212 : vector<1x128xf32> to vector<128xf32>
      %214 = vector.shape_cast %213 : vector<128xf32> to vector<1x128xf32>
      %215 = vector.broadcast %214 : vector<1x128xf32> to vector<8x128xf32>
      %216 = arith.addf %211, %215 : vector<8x128xf32>
      %c0_90 = arith.constant 0 : index
      %c0_91 = arith.constant 0 : index
      %217 = vector.load %arg18[%c0_90, %c0_91] : memref<8x128xf32, #tpu.memory_space<vmem>>, vector<8x128xf32>
      tpu.vector_store %arg18[%c0_90, %c0_91], %216 {strides = array<i32>} : memref<8x128xf32, #tpu.memory_space<vmem>>, vector<8x128xf32>,
    } else {
    }
    return
  }
  func.func @transform_0(%arg0: i32, %arg1: i32) -> (i32, i32) {
    %c0_i32 = arith.constant 0 : i32
    %c0_i32_0 = arith.constant 0 : i32
    return %arg0, %c0_i32 : i32, i32
  }
  func.func @transform_1(%arg0: i32, %arg1: i32) -> (i32, i32, i32) {
    %c0_i32 = arith.constant 0 : i32
    %c0_i32_0 = arith.constant 0 : i32
    %c0_i32_1 = arith.constant 0 : i32
    return %arg1, %c0_i32, %c0_i32_0 : i32, i32, i32
  }
  func.func @transform_2(%arg0: i32, %arg1: i32) -> (i32, i32, i32) {
    %c0_i32 = arith.constant 0 : i32
    %c0_i32_0 = arith.constant 0 : i32
    %c0_i32_1 = arith.constant 0 : i32
    return %arg1, %c0_i32, %c0_i32_0 : i32, i32, i32
  }
  func.func @transform_3(%arg0: i32, %arg1: i32) -> (i32, i32, i32) {
    %c0_i32 = arith.constant 0 : i32
    %c0_i32_0 = arith.constant 0 : i32
    %c0_i32_1 = arith.constant 0 : i32
    return %arg1, %c0_i32, %c0_i32_0 : i32, i32, i32
  }
  func.func @transform_4(%arg0: i32, %arg1: i32) -> (i32, i32, i32) {
    %c0_i32 = arith.constant 0 : i32
    %c0_i32_0 = arith.constant 0 : i32
    %c0_i32_1 = arith.constant 0 : i32
    return %arg1, %c0_i32, %c0_i32_0 : i32, i32, i32
  }
  func.func @transform_5(%arg0: i32, %arg1: i32) -> (i32, i32, i32) {
    %c0_i32 = arith.constant 0 : i32
    %c0_i32_0 = arith.constant 0 : i32
    %c0_i32_1 = arith.constant 0 : i32
    return %arg1, %c0_i32, %c0_i32_0 : i32, i32, i32
  }
  func.func @transform_6(%arg0: i32, %arg1: i32) -> (i32, i32, i32) {
    %c0_i32 = arith.constant 0 : i32
    %c0_i32_0 = arith.constant 0 : i32
    %c0_i32_1 = arith.constant 0 : i32
    return %arg1, %c0_i32, %c0_i32_0 : i32, i32, i32
  }
  func.func @transform_7(%arg0: i32, %arg1: i32) -> (i32, i32, i32) {
    %c0_i32 = arith.constant 0 : i32
    %c0_i32_0 = arith.constant 0 : i32
    %c0_i32_1 = arith.constant 0 : i32
    return %arg1, %c0_i32, %c0_i32_0 : i32, i32, i32
  }
  func.func @transform_8(%arg0: i32, %arg1: i32) -> (i32, i32, i32) {
    %c0_i32 = arith.constant 0 : i32
    %c0_i32_0 = arith.constant 0 : i32
    %c0_i32_1 = arith.constant 0 : i32
    return %arg1, %c0_i32, %c0_i32_0 : i32, i32, i32
  }
  func.func @transform_9(%arg0: i32, %arg1: i32) -> (i32, i32, i32) {
    %c0_i32 = arith.constant 0 : i32
    %c0_i32_0 = arith.constant 0 : i32
    %c0_i32_1 = arith.constant 0 : i32
    return %arg1, %c0_i32, %c0_i32_0 : i32, i32, i32
  }
  func.func @transform_10(%arg0: i32, %arg1: i32) -> (i32, i32, i32) {
    %c0_i32 = arith.constant 0 : i32
    %c0_i32_0 = arith.constant 0 : i32
    %c0_i32_1 = arith.constant 0 : i32
    return %arg1, %c0_i32, %c0_i32_0 : i32, i32, i32
  }
  func.func @transform_11(%arg0: i32, %arg1: i32) -> (i32, i32, i32) {
    %c0_i32 = arith.constant 0 : i32
    %c0_i32_0 = arith.constant 0 : i32
    %c0_i32_1 = arith.constant 0 : i32
    return %arg1, %c0_i32, %c0_i32_0 : i32, i32, i32
  }
  func.func @transform_12(%arg0: i32, %arg1: i32) -> (i32, i32) {
    %c0_i32 = arith.constant 0 : i32
    %c0_i32_0 = arith.constant 0 : i32
    %c0_i32_1 = arith.constant 0 : i32
    return %c0_i32, %c0_i32_0 : i32, i32
  }
  func.func @transform_13(%arg0: i32, %arg1: i32) -> (i32, i32) {
    %c0_i32 = arith.constant 0 : i32
    %c0_i32_0 = arith.constant 0 : i32
    %c0_i32_1 = arith.constant 0 : i32
    return %c0_i32, %c0_i32_0 : i32, i32
  }
  func.func @transform_14(%arg0: i32, %arg1: i32) -> (i32, i32) {
    %c0_i32 = arith.constant 0 : i32
    %c0_i32_0 = arith.constant 0 : i32
    %c0_i32_1 = arith.constant 0 : i32
    return %c0_i32, %c0_i32_0 : i32, i32
  }
  func.func @transform_15(%arg0: i32, %arg1: i32) -> (i32, i32) {
    %c0_i32 = arith.constant 0 : i32
    %c0_i32_0 = arith.constant 0 : i32
    %c0_i32_1 = arith.constant 0 : i32
    return %c0_i32, %c0_i32_0 : i32, i32
  }
  func.func @transform_16(%arg0: i32, %arg1: i32) -> (i32, i32) {
    %c0_i32 = arith.constant 0 : i32
    %c0_i32_0 = arith.constant 0 : i32
    return %arg0, %c0_i32 : i32, i32
  }
}

</mosaic_0001>

<llo_original>
// kernel: tpu_custom_call.1
$region0: #{tpu_custom_call.1}
  #allocation0 [shape = 'u32[]', space=smem, size = 0x4, offset = 0x4, fixed_abs, tag = 'smem constant byte address 0x4 - core index']
  #allocation1 [shape = 'u32[144,128]{1,0:T(1,128)}', space=vmem, size = 0x12000, scoped, tag = 'internal scratch']
  #allocation2 [shape = 'f32[8,32]{1,0:T(8,128)}', space=vmem, size = 0x1000, scoped, tag = 'scratch operand']
  %s0 = inlined_call_operand.vmem [shape: f32[16,32], index: 0, kind: input, shape index: {}]
  %s1 = inlined_call_operand.vmem [shape: f32[2,1,32], index: 1, kind: input, shape index: {}]
  %s2 = inlined_call_operand.vmem [shape: f32[2,1,32], index: 2, kind: input, shape index: {}]
  %s3 = inlined_call_operand.vmem [shape: f32[2,32,96], index: 3, kind: input, shape index: {}]
  %s4 = inlined_call_operand.vmem [shape: f32[2,32,32], index: 4, kind: input, shape index: {}]
  %s5 = inlined_call_operand.vmem [shape: f32[2,1,32], index: 5, kind: input, shape index: {}]
  %s6 = inlined_call_operand.vmem [shape: f32[2,1,32], index: 6, kind: input, shape index: {}]
  %s7 = inlined_call_operand.vmem [shape: f32[2,1,32], index: 7, kind: input, shape index: {}]
  %s8 = inlined_call_operand.vmem [shape: f32[2,32,128], index: 8, kind: input, shape index: {}]
  %s9 = inlined_call_operand.vmem [shape: f32[2,1,128], index: 9, kind: input, shape index: {}]
  %s10 = inlined_call_operand.vmem [shape: f32[2,128,32], index: 10, kind: input, shape index: {}]
  %s11 = inlined_call_operand.vmem [shape: f32[2,1,32], index: 11, kind: input, shape index: {}]
  %s12 = inlined_call_operand.vmem [shape: f32[1,32], index: 12, kind: input, shape index: {}]
  %s13 = inlined_call_operand.vmem [shape: f32[1,32], index: 13, kind: input, shape index: {}]
  %s14 = inlined_call_operand.vmem [shape: f32[32,128], index: 14, kind: input, shape index: {}]
  %s15 = inlined_call_operand.vmem [shape: f32[1,128], index: 15, kind: input, shape index: {}]
  %s16 = inlined_call_operand.hbm [shape: f32[16,128], index: 16, kind: output, shape index: {}]
  %s17 = sld [smem:[#allocation0]]
  $region105: #{tpu_custom_call.1} parent=0
    _
  %s19 = ssub.s32 1, %s17
  %s20 = scalar_select 0, %s19, %s17
  $region1: #{tpu_custom_call.1} parent=0
    #allocation3 [shape = 'u8[8192]{0}', space=vmem, size = 0x2000, scoped, tag = 'output window, operand 0']
    #allocation4 [shape = 's32[2]{0}', space=sflag, size = 0x8, scoped, tag = 'scoped memory for tpu_custom_call.1']
    %21 = vsyncpa [#allocation4], 0
    %s22 = scalar_lea.sflag [#allocation4], 1
    %23 = vsyncpa %s22, 0
    loop: start=0, step=1, limit=6
    $region2: #{tpu_custom_call.1} parent=1 // loop_pre_header
      _
    $region3: #{tpu_custom_call.1} parent=1 // loop_header
      %s25 = sphi 0, %s29
      %p26 = scmp.ge.s32.totalorder %s25, 6
      %s32 = sphi 0, %s44
      %s33 = sphi 0, %s40
      %s34 = sphi 0, %s32
      %s35 = sphi 0, %s33
      %s36 = sphi 0, %s34
      %s37 = sphi 0, %s35
      %s47 = sphi 0, %s49
      %s50 = sphi 0, %s47
      %s51 = sphi 0, %s50
      %s67 = sphi 0, %s51
      %s73 = sphi 0, %s75
      %s76 = sphi 0, %s73
      %s77 = sphi 0, %s76
      %s93 = sphi 0, %s77
      %s99 = sphi 0, %s101
      %s102 = sphi 0, %s99
      %s103 = sphi 0, %s102
      %s119 = sphi 0, %s103
      %s125 = sphi 0, %s127
      %s128 = sphi 0, %s125
      %s129 = sphi 0, %s128
      %s145 = sphi 0, %s129
      %s151 = sphi 0, %s153
      %s154 = sphi 0, %s151
      %s155 = sphi 0, %s154
      %s171 = sphi 0, %s155
      %s177 = sphi 0, %s179
      %s180 = sphi 0, %s177
      %s181 = sphi 0, %s180
      %s197 = sphi 0, %s181
      %s203 = sphi 0, %s205
      %s206 = sphi 0, %s203
      %s207 = sphi 0, %s206
      %s223 = sphi 0, %s207
      %s229 = sphi 0, %s231
      %s232 = sphi 0, %s229
      %s233 = sphi 0, %s232
      %s249 = sphi 0, %s233
      %s255 = sphi 0, %s257
      %s258 = sphi 0, %s255
      %s259 = sphi 0, %s258
      %s275 = sphi 0, %s259
      %s281 = sphi 0, %s283
      %s284 = sphi 0, %s281
      %s285 = sphi 0, %s284
      %s301 = sphi 0, %s285
      %s307 = sphi 0, %s309
      %s310 = sphi 0, %s307
      %s311 = sphi 0, %s310
      %s327 = sphi 0, %s311
      %s333 = sphi 0, %s335
      %s336 = sphi 0, %s333
      %s337 = sphi 0, %s336
      %s353 = sphi 0, %s337
      %s357 = sphi 0, %s357
      %s359 = sphi 0, %s357
      %s360 = sphi 0, %s359
      %s374 = sphi 0, %s360
      %s378 = sphi 0, %s378
      %s380 = sphi 0, %s378
      %s381 = sphi 0, %s380
      %s395 = sphi 0, %s381
      %s399 = sphi 0, %s399
      %s401 = sphi 0, %s399
      %s402 = sphi 0, %s401
      %s416 = sphi 0, %s402
      %s420 = sphi 0, %s420
      %s422 = sphi 0, %s420
      %s423 = sphi 0, %s422
      %s437 = sphi 0, %s423
      %s443 = sphi 0, %s445
      %s446 = sphi 0, %s443
      %s447 = sphi 0, %s446
      %s463 = sphi 0, %s447
    $region4: #{tpu_custom_call.1} parent=1 // loop_header_branch
      %28 = sbr.rel (%p26) target = $region8
    $region5: #{tpu_custom_call.1} parent=1 // loop_body
      %s30 = ssub.s32 %s25, 1
      %s31 = ssub.s32 %s25, 2
      %s38 = sadd.s32 1, %s33
      %p39 = scmp.ge.s32.totalorder %s38, 2
      %s40 = scalar_select %p39, 0, %s38
      %s41 = sadd.s32 1, %s32
      %s42 = scalar_select %p39, %s41, %s32
      %p43 = scmp.ge.s32.totalorder %s42, 2
      %s44 = scalar_select %p43, 0, %s42
      %s45 = ssub.s32 %s32, %s44
      %p46 = scmp.eq.s32.totalorder %s45, 0
      %s48 = sadd.s32 %s47, 1
      %s49 = scalar_select %p46, %s47, %s48
      %p52 = pneg %p46
      %p53 = scmp.eq.s32.totalorder %s25, 3
      %p54 = por %p52, %p53
      %p55 = scmp.ne.s32.totalorder %s47, %s50
      %p56 = scmp.eq.s32.totalorder %s25, 0
      %p57 = por %p55, %p56
      %p58 = scmp.ne.s32.totalorder %s47, %s50
      %p59 = scmp.eq.s32.totalorder %s30, 3
      %p60 = por %p58, %p59
      %p61 = scmp.ne.s32.totalorder %s50, %s51
      %p62 = scmp.eq.s32.totalorder %s30, 0
      %p63 = por %p61, %p62
      %p64 = scmp.ne.s32.totalorder %s50, %s51
      %p65 = scmp.eq.s32.totalorder %s31, 3
      %p66 = por %p64, %p65
      %p68 = scmp.ne.s32.totalorder %s51, %s67
      %p69 = scmp.eq.s32.totalorder %s31, 0
      %p70 = por %p68, %p69
      %s71 = ssub.s32 %s33, %s40
      %p72 = scmp.eq.s32.totalorder %s71, 0
      %s74 = sadd.s32 %s73, 1
      %s75 = scalar_select %p72, %s73, %s74
      %p78 = pneg %p72
      %p79 = scmp.eq.s32.totalorder %s25, 3
      %p80 = por %p78, %p79
      %p81 = scmp.ne.s32.totalorder %s73, %s76
      %p82 = scmp.eq.s32.totalorder %s25, 0
      %p83 = por %p81, %p82
      %p84 = scmp.ne.s32.totalorder %s73, %s76
      %p85 = scmp.eq.s32.totalorder %s30, 3
      %p86 = por %p84, %p85
      %p87 = scmp.ne.s32.totalorder %s76, %s77
      %p88 = scmp.eq.s32.totalorder %s30, 0
      %p89 = por %p87, %p88
      %p90 = scmp.ne.s32.totalorder %s76, %s77
      %p91 = scmp.eq.s32.totalorder %s31, 3
      %p92 = por %p90, %p91
      %p94 = scmp.ne.s32.totalorder %s77, %s93
      %p95 = scmp.eq.s32.totalorder %s31, 0
      %p96 = por %p94, %p95
      %s97 = ssub.s32 %s33, %s40
      %p98 = scmp.eq.s32.totalorder %s97, 0
      %s100 = sadd.s32 %s99, 1
      %s101 = scalar_select %p98, %s99, %s100
      %p104 = pneg %p98
      %p105 = scmp.eq.s32.totalorder %s25, 3
      %p106 = por %p104, %p105
      %p107 = scmp.ne.s32.totalorder %s99, %s102
      %p108 = scmp.eq.s32.totalorder %s25, 0
      %p109 = por %p107, %p108
      %p110 = scmp.ne.s32.totalorder %s99, %s102
      %p111 = scmp.eq.s32.totalorder %s30, 3
      %p112 = por %p110, %p111
      %p113 = scmp.ne.s32.totalorder %s102, %s103
      %p114 = scmp.eq.s32.totalorder %s30, 0
      %p115 = por %p113, %p114
      %p116 = scmp.ne.s32.totalorder %s102, %s103
      %p117 = scmp.eq.s32.totalorder %s31, 3
      %p118 = por %p116, %p117
      %p120 = scmp.ne.s32.totalorder %s103, %s119
      %p121 = scmp.eq.s32.totalorder %s31, 0
      %p122 = por %p120, %p121
      %s123 = ssub.s32 %s33, %s40
      %p124 = scmp.eq.s32.totalorder %s123, 0
      %s126 = sadd.s32 %s125, 1
      %s127 = scalar_select %p124, %s125, %s126
      %p130 = pneg %p124
      %p131 = scmp.eq.s32.totalorder %s25, 3
      %p132 = por %p130, %p131
      %p133 = scmp.ne.s32.totalorder %s125, %s128
      %p134 = scmp.eq.s32.totalorder %s25, 0
      %p135 = por %p133, %p134
      %p136 = scmp.ne.s32.totalorder %s125, %s128
      %p137 = scmp.eq.s32.totalorder %s30, 3
      %p138 = por %p136, %p137
      %p139 = scmp.ne.s32.totalorder %s128, %s129
      %p140 = scmp.eq.s32.totalorder %s30, 0
      %p141 = por %p139, %p140
      %p142 = scmp.ne.s32.totalorder %s128, %s129
      %p143 = scmp.eq.s32.totalorder %s31, 3
      %p144 = por %p142, %p143
      %p146 = scmp.ne.s32.totalorder %s129, %s145
      %p147 = scmp.eq.s32.totalorder %s31, 0
      %p148 = por %p146, %p147
      %s149 = ssub.s32 %s33, %s40
      %p150 = scmp.eq.s32.totalorder %s149, 0
      %s152 = sadd.s32 %s151, 1
      %s153 = scalar_select %p150, %s151, %s152
      %p156 = pneg %p150
      %p157 = scmp.eq.s32.totalorder %s25, 3
      %p158 = por %p156, %p157
      %p159 = scmp.ne.s32.totalorder %s151, %s154
      %p160 = scmp.eq.s32.totalorder %s25, 0
      %p161 = por %p159, %p160
      %p162 = scmp.ne.s32.totalorder %s151, %s154
      %p163 = scmp.eq.s32.totalorder %s30, 3
      %p164 = por %p162, %p163
      %p165 = scmp.ne.s32.totalorder %s154, %s155
      %p166 = scmp.eq.s32.totalorder %s30, 0
      %p167 = por %p165, %p166
      %p168 = scmp.ne.s32.totalorder %s154, %s155
      %p169 = scmp.eq.s32.totalorder %s31, 3
      %p170 = por %p168, %p169
      %p172 = scmp.ne.s32.totalorder %s155, %s171
      %p173 = scmp.eq.s32.totalorder %s31, 0
      %p174 = por %p172, %p173
      %s175 = ssub.s32 %s33, %s40
      %p176 = scmp.eq.s32.totalorder %s175, 0
      %s178 = sadd.s32 %s177, 1
      %s179 = scalar_select %p176, %s177, %s178
      %p182 = pneg %p176
      %p183 = scmp.eq.s32.totalorder %s25, 3
      %p184 = por %p182, %p183
      %p185 = scmp.ne.s32.totalorder %s177, %s180
      %p186 = scmp.eq.s32.totalorder %s25, 0
      %p187 = por %p185, %p186
      %p188 = scmp.ne.s32.totalorder %s177, %s180
      %p189 = scmp.eq.s32.totalorder %s30, 3
      %p190 = por %p188, %p189
      %p191 = scmp.ne.s32.totalorder %s180, %s181
      %p192 = scmp.eq.s32.totalorder %s30, 0
      %p193 = por %p191, %p192
      %p194 = scmp.ne.s32.totalorder %s180, %s181
      %p195 = scmp.eq.s32.totalorder %s31, 3
      %p196 = por %p194, %p195
      %p198 = scmp.ne.s32.totalorder %s181, %s197
      %p199 = scmp.eq.s32.totalorder %s31, 0
      %p200 = por %p198, %p199
      %s201 = ssub.s32 %s33, %s40
      %p202 = scmp.eq.s32.totalorder %s201, 0
      %s204 = sadd.s32 %s203, 1
      %s205 = scalar_select %p202, %s203, %s204
      %p208 = pneg %p202
      %p209 = scmp.eq.s32.totalorder %s25, 3
      %p210 = por %p208, %p209
      %p211 = scmp.ne.s32.totalorder %s203, %s206
      %p212 = scmp.eq.s32.totalorder %s25, 0
      %p213 = por %p211, %p212
      %p214 = scmp.ne.s32.totalorder %s203, %s206
      %p215 = scmp.eq.s32.totalorder %s30, 3
      %p216 = por %p214, %p215
      %p217 = scmp.ne.s32.totalorder %s206, %s207
      %p218 = scmp.eq.s32.totalorder %s30, 0
      %p219 = por %p217, %p218
      %p220 = scmp.ne.s32.totalorder %s206, %s207
      %p221 = scmp.eq.s32.totalorder %s31, 3
      %p222 = por %p220, %p221
      %p224 = scmp.ne.s32.totalorder %s207, %s223
      %p225 = scmp.eq.s32.totalorder %s31, 0
      %p226 = por %p224, %p225
      %s227 = ssub.s32 %s33, %s40
      %p228 = scmp.eq.s32.totalorder %s227, 0
      %s230 = sadd.s32 %s229, 1
      %s231 = scalar_select %p228, %s229, %s230
      %p234 = pneg %p228
      %p235 = scmp.eq.s32.totalorder %s25, 3
      %p236 = por %p234, %p235
      %p237 = scmp.ne.s32.totalorder %s229, %s232
      %p238 = scmp.eq.s32.totalorder %s25, 0
      %p239 = por %p237, %p238
      %p240 = scmp.ne.s32.totalorder %s229, %s232
      %p241 = scmp.eq.s32.totalorder %s30, 3
      %p242 = por %p240, %p241
      %p243 = scmp.ne.s32.totalorder %s232, %s233
      %p244 = scmp.eq.s32.totalorder %s30, 0
      %p245 = por %p243, %p244
      %p246 = scmp.ne.s32.totalorder %s232, %s233
      %p247 = scmp.eq.s32.totalorder %s31, 3
      %p248 = por %p246, %p247
      %p250 = scmp.ne.s32.totalorder %s233, %s249
      %p251 = scmp.eq.s32.totalorder %s31, 0
      %p252 = por %p250, %p251
      %s253 = ssub.s32 %s33, %s40
      %p254 = scmp.eq.s32.totalorder %s253, 0
      %s256 = sadd.s32 %s255, 1
      %s257 = scalar_select %p254, %s255, %s256
      %p260 = pneg %p254
      %p261 = scmp.eq.s32.totalorder %s25, 3
      %p262 = por %p260, %p261
      %p263 = scmp.ne.s32.totalorder %s255, %s258
      %p264 = scmp.eq.s32.totalorder %s25, 0
      %p265 = por %p263, %p264
      %p266 = scmp.ne.s32.totalorder %s255, %s258
      %p267 = scmp.eq.s32.totalorder %s30, 3
      %p268 = por %p266, %p267
      %p269 = scmp.ne.s32.totalorder %s258, %s259
      %p270 = scmp.eq.s32.totalorder %s30, 0
      %p271 = por %p269, %p270
      %p272 = scmp.ne.s32.totalorder %s258, %s259
      %p273 = scmp.eq.s32.totalorder %s31, 3
      %p274 = por %p272, %p273
      %p276 = scmp.ne.s32.totalorder %s259, %s275
      %p277 = scmp.eq.s32.totalorder %s31, 0
      %p278 = por %p276, %p277
      %s279 = ssub.s32 %s33, %s40
      %p280 = scmp.eq.s32.totalorder %s279, 0
      %s282 = sadd.s32 %s281, 1
      %s283 = scalar_select %p280, %s281, %s282
      %p286 = pneg %p280
      %p287 = scmp.eq.s32.totalorder %s25, 3
      %p288 = por %p286, %p287
      %p289 = scmp.ne.s32.totalorder %s281, %s284
      %p290 = scmp.eq.s32.totalorder %s25, 0
      %p291 = por %p289, %p290
      %p292 = scmp.ne.s32.totalorder %s281, %s284
      %p293 = scmp.eq.s32.totalorder %s30, 3
      %p294 = por %p292, %p293
      %p295 = scmp.ne.s32.totalorder %s284, %s285
      %p296 = scmp.eq.s32.totalorder %s30, 0
      %p297 = por %p295, %p296
      %p298 = scmp.ne.s32.totalorder %s284, %s285
      %p299 = scmp.eq.s32.totalorder %s31, 3
      %p300 = por %p298, %p299
      %p302 = scmp.ne.s32.totalorder %s285, %s301
      %p303 = scmp.eq.s32.totalorder %s31, 0
      %p304 = por %p302, %p303
      %s305 = ssub.s32 %s33, %s40
      %p306 = scmp.eq.s32.totalorder %s305, 0
      %s308 = sadd.s32 %s307, 1
      %s309 = scalar_select %p306, %s307, %s308
      %p312 = pneg %p306
      %p313 = scmp.eq.s32.totalorder %s25, 3
      %p314 = por %p312, %p313
      %p315 = scmp.ne.s32.totalorder %s307, %s310
      %p316 = scmp.eq.s32.totalorder %s25, 0
      %p317 = por %p315, %p316
      %p318 = scmp.ne.s32.totalorder %s307, %s310
      %p319 = scmp.eq.s32.totalorder %s30, 3
      %p320 = por %p318, %p319
      %p321 = scmp.ne.s32.totalorder %s310, %s311
      %p322 = scmp.eq.s32.totalorder %s30, 0
      %p323 = por %p321, %p322
      %p324 = scmp.ne.s32.totalorder %s310, %s311
      %p325 = scmp.eq.s32.totalorder %s31, 3
      %p326 = por %p324, %p325
      %p328 = scmp.ne.s32.totalorder %s311, %s327
      %p329 = scmp.eq.s32.totalorder %s31, 0
      %p330 = por %p328, %p329
      %s331 = ssub.s32 %s33, %s40
      %p332 = scmp.eq.s32.totalorder %s331, 0
      %s334 = sadd.s32 %s333, 1
      %s335 = scalar_select %p332, %s333, %s334
      %p338 = pneg %p332
      %p339 = scmp.eq.s32.totalorder %s25, 3
      %p340 = por %p338, %p339
      %p341 = scmp.ne.s32.totalorder %s333, %s336
      %p342 = scmp.eq.s32.totalorder %s25, 0
      %p343 = por %p341, %p342
      %p344 = scmp.ne.s32.totalorder %s333, %s336
      %p345 = scmp.eq.s32.totalorder %s30, 3
      %p346 = por %p344, %p345
      %p347 = scmp.ne.s32.totalorder %s336, %s337
      %p348 = scmp.eq.s32.totalorder %s30, 0
      %p349 = por %p347, %p348
      %p350 = scmp.ne.s32.totalorder %s336, %s337
      %p351 = scmp.eq.s32.totalorder %s31, 3
      %p352 = por %p350, %p351
      %p354 = scmp.ne.s32.totalorder %s337, %s353
      %p355 = scmp.eq.s32.totalorder %s31, 0
      %p356 = por %p354, %p355
      %s358 = sadd.s32 %s357, 1
      %p361 = scmp.eq.s32.totalorder %s25, 3
      %p362 = scmp.ne.s32.totalorder %s357, %s359
      %p363 = scmp.eq.s32.totalorder %s25, 0
      %p364 = por %p362, %p363
      %p365 = scmp.ne.s32.totalorder %s357, %s359
      %p366 = scmp.eq.s32.totalorder %s30, 3
      %p367 = por %p365, %p366
      %p368 = scmp.ne.s32.totalorder %s359, %s360
      %p369 = scmp.eq.s32.totalorder %s30, 0
      %p370 = por %p368, %p369
      %p371 = scmp.ne.s32.totalorder %s359, %s360
      %p372 = scmp.eq.s32.totalorder %s31, 3
      %p373 = por %p371, %p372
      %p375 = scmp.ne.s32.totalorder %s360, %s374
      %p376 = scmp.eq.s32.totalorder %s31, 0
      %p377 = por %p375, %p376
      %s379 = sadd.s32 %s378, 1
      %p382 = scmp.eq.s32.totalorder %s25, 3
      %p383 = scmp.ne.s32.totalorder %s378, %s380
      %p384 = scmp.eq.s32.totalorder %s25, 0
      %p385 = por %p383, %p384
      %p386 = scmp.ne.s32.totalorder %s378, %s380
      %p387 = scmp.eq.s32.totalorder %s30, 3
      %p388 = por %p386, %p387
      %p389 = scmp.ne.s32.totalorder %s380, %s381
      %p390 = scmp.eq.s32.totalorder %s30, 0
      %p391 = por %p389, %p390
      %p392 = scmp.ne.s32.totalorder %s380, %s381
      %p393 = scmp.eq.s32.totalorder %s31, 3
      %p394 = por %p392, %p393
      %p396 = scmp.ne.s32.totalorder %s381, %s395
      %p397 = scmp.eq.s32.totalorder %s31, 0
      %p398 = por %p396, %p397
      %s400 = sadd.s32 %s399, 1
      %p403 = scmp.eq.s32.totalorder %s25, 3
      %p404 = scmp.ne.s32.totalorder %s399, %s401
      %p405 = scmp.eq.s32.totalorder %s25, 0
      %p406 = por %p404, %p405
      %p407 = scmp.ne.s32.totalorder %s399, %s401
      %p408 = scmp.eq.s32.totalorder %s30, 3
      %p409 = por %p407, %p408
      %p410 = scmp.ne.s32.totalorder %s401, %s402
      %p411 = scmp.eq.s32.totalorder %s30, 0
      %p412 = por %p410, %p411
      %p413 = scmp.ne.s32.totalorder %s401, %s402
      %p414 = scmp.eq.s32.totalorder %s31, 3
      %p415 = por %p413, %p414
      %p417 = scmp.ne.s32.totalorder %s402, %s416
      %p418 = scmp.eq.s32.totalorder %s31, 0
      %p419 = por %p417, %p418
      %s421 = sadd.s32 %s420, 1
      %p424 = scmp.eq.s32.totalorder %s25, 3
      %p425 = scmp.ne.s32.totalorder %s420, %s422
      %p426 = scmp.eq.s32.totalorder %s25, 0
      %p427 = por %p425, %p426
      %p428 = scmp.ne.s32.totalorder %s420, %s422
      %p429 = scmp.eq.s32.totalorder %s30, 3
      %p430 = por %p428, %p429
      %p431 = scmp.ne.s32.totalorder %s422, %s423
      %p432 = scmp.eq.s32.totalorder %s30, 0
      %p433 = por %p431, %p432
      %p434 = scmp.ne.s32.totalorder %s422, %s423
      %p435 = scmp.eq.s32.totalorder %s31, 3
      %p436 = por %p434, %p435
      %p438 = scmp.ne.s32.totalorder %s423, %s437
      %p439 = scmp.eq.s32.totalorder %s31, 0
      %p440 = por %p438, %p439
      %s441 = ssub.s32 %s32, %s44
      %p442 = scmp.eq.s32.totalorder %s441, 0
      %s444 = sadd.s32 %s443, 1
      %s445 = scalar_select %p442, %s443, %s444
      %p448 = pneg %p442
      %p449 = scmp.eq.s32.totalorder %s25, 3
      %p450 = por %p448, %p449
      %p451 = scmp.ne.s32.totalorder %s443, %s446
      %p452 = scmp.eq.s32.totalorder %s25, 0
      %p453 = por %p451, %p452
      %p454 = scmp.ne.s32.totalorder %s443, %s446
      %p455 = scmp.eq.s32.totalorder %s30, 3
      %p456 = por %p454, %p455
      %p457 = scmp.ne.s32.totalorder %s446, %s447
      %p458 = scmp.eq.s32.totalorder %s30, 0
      %p459 = por %p457, %p458
      %p460 = scmp.ne.s32.totalorder %s446, %s447
      %p461 = scmp.eq.s32.totalorder %s31, 3
      %p462 = por %p460, %p461
      %p464 = scmp.ne.s32.totalorder %s447, %s463
      %p465 = scmp.eq.s32.totalorder %s31, 0
      %p466 = por %p464, %p465
      %p467 = scmp.le.s32.totalorder 1, %s25
      %p468 = scmp.lt.s32.totalorder %s25, 5
      %p469 = pnand %p467, %p468
      %p470 = pneg %p469
      // Predicated region
      $region9: #{tpu_custom_call.1} parent=5 // pred_check
        _
      $region10: #{tpu_custom_call.1} parent=5 // pred_check_branch
        %472 = sbr.rel (%p469) target = $region12
      $region11: #{tpu_custom_call.1} parent=5 // pred_region
        %s473 = ssub.s32 %s25, 1
        // Predicated region
        $region13: #{tpu_custom_call.1} parent=11 // pred_check
          %p474 = pneg %p370
        $region14: #{tpu_custom_call.1} parent=11 // pred_check_branch
          %476 = sbr.rel (%p474) target = $region16
        $region15: #{tpu_custom_call.1} parent=11 // pred_region
          _
        $region16: #{tpu_custom_call.1} parent=11 // pred_fallthru
          _
        // Predicated region
        $region17: #{tpu_custom_call.1} parent=11 // pred_check
          %p477 = pneg %p391
        $region18: #{tpu_custom_call.1} parent=11 // pred_check_branch
          %479 = sbr.rel (%p477) target = $region20
        $region19: #{tpu_custom_call.1} parent=11 // pred_region
          _
        $region20: #{tpu_custom_call.1} parent=11 // pred_fallthru
          _
        // Predicated region
        $region21: #{tpu_custom_call.1} parent=11 // pred_check
          %p480 = pneg %p412
        $region22: #{tpu_custom_call.1} parent=11 // pred_check_branch
          %482 = sbr.rel (%p480) target = $region24
        $region23: #{tpu_custom_call.1} parent=11 // pred_region
          _
        $region24: #{tpu_custom_call.1} parent=11 // pred_fallthru
          _
        // Predicated region
        $region25: #{tpu_custom_call.1} parent=11 // pred_check
          %p483 = pneg %p433
        $region26: #{tpu_custom_call.1} parent=11 // pred_check_branch
          %485 = sbr.rel (%p483) target = $region28
        $region27: #{tpu_custom_call.1} parent=11 // pred_region
          _
        $region28: #{tpu_custom_call.1} parent=11 // pred_fallthru
          _
      $region12: #{tpu_custom_call.1} parent=5 // pred_fallthru
        _
      %p486 = scmp.lt.s32.totalorder %s25, 4
      // Predicated region
      $region29: #{tpu_custom_call.1} parent=5 // pred_check
        %p487 = pneg %p486
      $region30: #{tpu_custom_call.1} parent=5 // pred_check_branch
        %489 = sbr.rel (%p487) target = $region32
      $region31: #{tpu_custom_call.1} parent=5 // pred_region
        // Predicated region
        $region33: #{tpu_custom_call.1} parent=31 // pred_check
          %p490 = pneg %p57
        $region34: #{tpu_custom_call.1} parent=31 // pred_check_branch
          %492 = sbr.rel (%p490) target = $region36
        $region35: #{tpu_custom_call.1} parent=31 // pred_region
          %p493 = scmp.lt.s32.totalorder %s32, 1
          %s494 = scalar_select %p493, %s32, 1
          %s495 = smul.addr %s494, 8
          %s496 = scalar_lea.vmem %s0, %s495
        $region36: #{tpu_custom_call.1} parent=31 // pred_fallthru
          _
        // Predicated region
        $region37: #{tpu_custom_call.1} parent=31 // pred_check
          %p497 = pneg %p83
        $region38: #{tpu_custom_call.1} parent=31 // pred_check_branch
          %499 = sbr.rel (%p497) target = $region40
        $region39: #{tpu_custom_call.1} parent=31 // pred_region
          %p500 = scmp.lt.s32.totalorder %s33, 1
          %s501 = scalar_select %p500, %s33, 1
          %s502 = scalar_lea.vmem %s1, %s501
        $region40: #{tpu_custom_call.1} parent=31 // pred_fallthru
          _
        // Predicated region
        $region41: #{tpu_custom_call.1} parent=31 // pred_check
          %p503 = pneg %p109
        $region42: #{tpu_custom_call.1} parent=31 // pred_check_branch
          %505 = sbr.rel (%p503) target = $region44
        $region43: #{tpu_custom_call.1} parent=31 // pred_region
          %p506 = scmp.lt.s32.totalorder %s33, 1
          %s507 = scalar_select %p506, %s33, 1
          %s508 = scalar_lea.vmem %s2, %s507
        $region44: #{tpu_custom_call.1} parent=31 // pred_fallthru
          _
        // Predicated region
        $region45: #{tpu_custom_call.1} parent=31 // pred_check
          %p509 = pneg %p135
        $region46: #{tpu_custom_call.1} parent=31 // pred_check_branch
          %511 = sbr.rel (%p509) target = $region48
        $region47: #{tpu_custom_call.1} parent=31 // pred_region
          %p512 = scmp.lt.s32.totalorder %s33, 1
          %s513 = scalar_select %p512, %s33, 1
          %s514 = smul.addr %s513, 4
          %s515 = smul.addr %s514, 8
          %s516 = scalar_lea.vmem %s3, %s515
        $region48: #{tpu_custom_call.1} parent=31 // pred_fallthru
          _
        // Predicated region
        $region49: #{tpu_custom_call.1} parent=31 // pred_check
          %p517 = pneg %p161
        $region50: #{tpu_custom_call.1} parent=31 // pred_check_branch
          %519 = sbr.rel (%p517) target = $region52
        $region51: #{tpu_custom_call.1} parent=31 // pred_region
          %p520 = scmp.lt.s32.totalorder %s33, 1
          %s521 = scalar_select %p520, %s33, 1
          %s522 = smul.addr %s521, 4
          %s523 = smul.addr %s522, 8
          %s524 = scalar_lea.vmem %s4, %s523
        $region52: #{tpu_custom_call.1} parent=31 // pred_fallthru
          _
        // Predicated region
        $region53: #{tpu_custom_call.1} parent=31 // pred_check
          %p525 = pneg %p187
        $region54: #{tpu_custom_call.1} parent=31 // pred_check_branch
          %527 = sbr.rel (%p525) target = $region56
        $region55: #{tpu_custom_call.1} parent=31 // pred_region
          %p528 = scmp.lt.s32.totalorder %s33, 1
          %s529 = scalar_select %p528, %s33, 1
          %s530 = scalar_lea.vmem %s5, %s529
        $region56: #{tpu_custom_call.1} parent=31 // pred_fallthru
          _
        // Predicated region
        $region57: #{tpu_custom_call.1} parent=31 // pred_check
          %p531 = pneg %p213
        $region58: #{tpu_custom_call.1} parent=31 // pred_check_branch
          %533 = sbr.rel (%p531) target = $region60
        $region59: #{tpu_custom_call.1} parent=31 // pred_region
          %p534 = scmp.lt.s32.totalorder %s33, 1
          %s535 = scalar_select %p534, %s33, 1
          %s536 = scalar_lea.vmem %s6, %s535
        $region60: #{tpu_custom_call.1} parent=31 // pred_fallthru
          _
        // Predicated region
        $region61: #{tpu_custom_call.1} parent=31 // pred_check
          %p537 = pneg %p239
        $region62: #{tpu_custom_call.1} parent=31 // pred_check_branch
          %539 = sbr.rel (%p537) target = $region64
        $region63: #{tpu_custom_call.1} parent=31 // pred_region
          %p540 = scmp.lt.s32.totalorder %s33, 1
          %s541 = scalar_select %p540, %s33, 1
          %s542 = scalar_lea.vmem %s7, %s541
        $region64: #{tpu_custom_call.1} parent=31 // pred_fallthru
          _
        // Predicated region
        $region65: #{tpu_custom_call.1} parent=31 // pred_check
          %p543 = pneg %p265
        $region66: #{tpu_custom_call.1} parent=31 // pred_check_branch
          %545 = sbr.rel (%p543) target = $region68
        $region67: #{tpu_custom_call.1} parent=31 // pred_region
          %p546 = scmp.lt.s32.totalorder %s33, 1
          %s547 = scalar_select %p546, %s33, 1
          %s548 = smul.addr %s547, 4
          %s549 = smul.addr %s548, 8
          %s550 = scalar_lea.vmem %s8, %s549
        $region68: #{tpu_custom_call.1} parent=31 // pred_fallthru
          _
        // Predicated region
        $region69: #{tpu_custom_call.1} parent=31 // pred_check
          %p551 = pneg %p291
        $region70: #{tpu_custom_call.1} parent=31 // pred_check_branch
          %553 = sbr.rel (%p551) target = $region72
        $region71: #{tpu_custom_call.1} parent=31 // pred_region
          %p554 = scmp.lt.s32.totalorder %s33, 1
          %s555 = scalar_select %p554, %s33, 1
          %s556 = scalar_lea.vmem %s9, %s555
        $region72: #{tpu_custom_call.1} parent=31 // pred_fallthru
          _
        // Predicated region
        $region73: #{tpu_custom_call.1} parent=31 // pred_check
          %p557 = pneg %p317
        $region74: #{tpu_custom_call.1} parent=31 // pred_check_branch
          %559 = sbr.rel (%p557) target = $region76
        $region75: #{tpu_custom_call.1} parent=31 // pred_region
          %p560 = scmp.lt.s32.totalorder %s33, 1
          %s561 = scalar_select %p560, %s33, 1
          %s562 = smul.addr %s561, 16
          %s563 = smul.addr %s562, 8
          %s564 = scalar_lea.vmem %s10, %s563
        $region76: #{tpu_custom_call.1} parent=31 // pred_fallthru
          _
        // Predicated region
        $region77: #{tpu_custom_call.1} parent=31 // pred_check
          %p565 = pneg %p343
        $region78: #{tpu_custom_call.1} parent=31 // pred_check_branch
          %567 = sbr.rel (%p565) target = $region80
        $region79: #{tpu_custom_call.1} parent=31 // pred_region
          %p568 = scmp.lt.s32.totalorder %s33, 1
          %s569 = scalar_select %p568, %s33, 1
          %s570 = scalar_lea.vmem %s11, %s569
        $region80: #{tpu_custom_call.1} parent=31 // pred_fallthru
          _
      $region32: #{tpu_custom_call.1} parent=5 // pred_fallthru
        _
      %p571 = scmp.le.s32.totalorder 1, %s25
      %p572 = scmp.lt.s32.totalorder %s25, 5
      %p573 = pnand %p571, %p572
      %p574 = pneg %p573
      // Predicated region
      $region81: #{tpu_custom_call.1} parent=5 // pred_check
        _
      $region82: #{tpu_custom_call.1} parent=5 // pred_check_branch
        %576 = sbr.rel (%p573) target = $region84
      $region83: #{tpu_custom_call.1} parent=5 // pred_region
        %s577 = ssub.s32 %s25, 1
        %p578 = scmp.lt.s32.totalorder %s34, 1
        %s579 = scalar_select %p578, %s34, 1
        %s580 = smul.addr %s579, 8
        %s581 = scalar_lea.vmem %s0, %s580
        %p582 = pneg %p63
        %p583 = pneg %p60
        %p584 = scmp.lt.s32.totalorder %s35, 1
        %s585 = scalar_select %p584, %s35, 1
        %s586 = scalar_lea.vmem %s1, %s585
        %p587 = pneg %p89
        %p588 = pneg %p86
        %p589 = scmp.lt.s32.totalorder %s35, 1
        %s590 = scalar_select %p589, %s35, 1
        %s591 = scalar_lea.vmem %s2, %s590
        %p592 = pneg %p115
        %p593 = pneg %p112
        %p594 = scmp.lt.s32.totalorder %s35, 1
        %s595 = scalar_select %p594, %s35, 1
        %s596 = smul.addr %s595, 4
        %s597 = smul.addr %s596, 8
        %s598 = scalar_lea.vmem %s3, %s597
        %p599 = pneg %p141
        %p600 = pneg %p138
        %p601 = scmp.lt.s32.totalorder %s35, 1
        %s602 = scalar_select %p601, %s35, 1
        %s603 = smul.addr %s602, 4
        %s604 = smul.addr %s603, 8
        %s605 = scalar_lea.vmem %s4, %s604
        %p606 = pneg %p167
        %p607 = pneg %p164
        %p608 = scmp.lt.s32.totalorder %s35, 1
        %s609 = scalar_select %p608, %s35, 1
        %s610 = scalar_lea.vmem %s5, %s609
        %p611 = pneg %p193
        %p612 = pneg %p190
        %p613 = scmp.lt.s32.totalorder %s35, 1
        %s614 = scalar_select %p613, %s35, 1
        %s615 = scalar_lea.vmem %s6, %s614
        %p616 = pneg %p219
        %p617 = pneg %p216
        %p618 = scmp.lt.s32.totalorder %s35, 1
        %s619 = scalar_select %p618, %s35, 1
        %s620 = scalar_lea.vmem %s7, %s619
        %p621 = pneg %p245
        %p622 = pneg %p242
        %p623 = scmp.lt.s32.totalorder %s35, 1
        %s624 = scalar_select %p623, %s35, 1
        %s625 = smul.addr %s624, 4
        %s626 = smul.addr %s625, 8
        %s627 = scalar_lea.vmem %s8, %s626
        %p628 = pneg %p271
        %p629 = pneg %p268
        %p630 = scmp.lt.s32.totalorder %s35, 1
        %s631 = scalar_select %p630, %s35, 1
        %s632 = scalar_lea.vmem %s9, %s631
        %p633 = pneg %p297
        %p634 = pneg %p294
        %p635 = scmp.lt.s32.totalorder %s35, 1
        %s636 = scalar_select %p635, %s35, 1
        %s637 = smul.addr %s636, 16
        %s638 = smul.addr %s637, 8
        %s639 = scalar_lea.vmem %s10, %s638
        %p640 = pneg %p323
        %p641 = pneg %p320
        %p642 = scmp.lt.s32.totalorder %s35, 1
        %s643 = scalar_select %p642, %s35, 1
        %s644 = scalar_lea.vmem %s11, %s643
        %p645 = pneg %p349
        %p646 = pneg %p346
        %p647 = pneg %p370
        %p648 = pneg %p367
        %p649 = pneg %p391
        %p650 = pneg %p388
        %p651 = pneg %p412
        %p652 = pneg %p409
        %p653 = pneg %p433
        %p654 = pneg %p430
        %p655 = pneg %p459
        %p656 = pneg %p456
        %s657 = sand.u32 %s446, 1
        %s658 = scalar_lea.sflag [#allocation4], %s657
        %s659 = sand.u32 %s446, 1
        %s660 = smul.addr %s659, 8
        %s661 = scalar_lea.vmem [#allocation3], %s660
        %p662 = scmp.lt.s32.totalorder %s34, 1
        %s663 = scalar_select %p662, %s34, 1
        %s664 = smul.addr %s663, 8
        %s665 = scalar_lea.vmem %s0, %s664
        %p666 = scmp.lt.s32.totalorder %s35, 1
        %s667 = scalar_select %p666, %s35, 1
        %s668 = scalar_lea.vmem %s1, %s667
        %p669 = scmp.lt.s32.totalorder %s35, 1
        %s670 = scalar_select %p669, %s35, 1
        %s671 = scalar_lea.vmem %s2, %s670
        %p672 = scmp.lt.s32.totalorder %s35, 1
        %s673 = scalar_select %p672, %s35, 1
        %s674 = smul.addr %s673, 4
        %s675 = smul.addr %s674, 8
        %s676 = scalar_lea.vmem %s3, %s675
        %p677 = scmp.lt.s32.totalorder %s35, 1
        %s678 = scalar_select %p677, %s35, 1
        %s679 = smul.addr %s678, 4
        %s680 = smul.addr %s679, 8
        %s681 = scalar_lea.vmem %s4, %s680
        %p682 = scmp.lt.s32.totalorder %s35, 1
        %s683 = scalar_select %p682, %s35, 1
        %s684 = scalar_lea.vmem %s5, %s683
        %p685 = scmp.lt.s32.totalorder %s35, 1
        %s686 = scalar_select %p685, %s35, 1
        %s687 = scalar_lea.vmem %s6, %s686
        %p688 = scmp.lt.s32.totalorder %s35, 1
        %s689 = scalar_select %p688, %s35, 1
        %s690 = scalar_lea.vmem %s7, %s689
        %p691 = scmp.lt.s32.totalorder %s35, 1
        %s692 = scalar_select %p691, %s35, 1
        %s693 = smul.addr %s692, 4
        %s694 = smul.addr %s693, 8
        %s695 = scalar_lea.vmem %s8, %s694
        %p696 = scmp.lt.s32.totalorder %s35, 1
        %s697 = scalar_select %p696, %s35, 1
        %s698 = scalar_lea.vmem %s9, %s697
        %p699 = scmp.lt.s32.totalorder %s35, 1
        %s700 = scalar_select %p699, %s35, 1
        %s701 = smul.addr %s700, 16
        %s702 = smul.addr %s701, 8
        %s703 = scalar_lea.vmem %s10, %s702
        %p704 = scmp.lt.s32.totalorder %s35, 1
        %s705 = scalar_select %p704, %s35, 1
        %s706 = scalar_lea.vmem %s11, %s705
        %p707 = scmp.eq.s32.totalorder %s35, 0
        // Predicated region
        $region85: #{tpu_custom_call.1} parent=83 // pred_check
          %p708 = pneg %p707
        $region86: #{tpu_custom_call.1} parent=83 // pred_check_branch
          %710 = sbr.rel (%p708) target = $region88
        $region87: #{tpu_custom_call.1} parent=83 // pred_region
          %v711 = vld [vmem:[%s665] sm:$0xff]
          %vm712 = vcmask 261120
          %713 = vst.msk [vmem:[#allocation2] sm:$0xff] %vm712, %v711
        $region88: #{tpu_custom_call.1} parent=83 // pred_fallthru
          _
        %v714 = vld [vmem:[#allocation2] sm:$0xff]
        %v715 = vld [vmem:[%s668] sm:$0x1]
        %v716 = vld [vmem:[%s671] sm:$0x1]
        %vm717 = vcmask 261120
        %v718 = vsel %vm717, %v714, 0.0
        %719 = vadd.xlane.f32.xlu0 %v718
        %v720 = vpop.xlane.xlu0 %719
        %v721 = vrcp.pop 32.0
        %v722 = vmul.f32 %v720, %v721
        %v723 = vsub.f32 %v714, %v722
        %v724 = vmul.f32 %v723, %v723
        %v725 = vsel %vm717, %v724, 0.0
        %726 = vadd.xlane.f32.xlu0 %v725
        %v727 = vpop.xlane.xlu0 %726
        %v728 = vmul.f32 %v727, %v721
        %v729 = vadd.f32 %v728, 1e-05
        %v730 = vrsqrt.pop %v729
        %v731 = vmul.f32 %v723, %v730
        %v733 = vlaneseq
        %v734 = vshrl.u32 %v733, 7
        %v735 = vsub.s32 0, %v734
        %v736 = vrot.slane %v715, %v735
        %v738 = vmul.f32 %v731, %v736
        %v740 = vlaneseq
        %v741 = vshrl.u32 %v740, 7
        %v742 = vsub.s32 0, %v741
        %v743 = vrot.slane %v716, %v742
        %v745 = vadd.f32 %v738, %v743
        %v746 = vld [vmem:[%s676] sm:$0xff]
        %v747 = vld [vmem:[%s676 + $0x8] sm:$0xff]
        %v748 = vld [vmem:[%s676 + $0x10] sm:$0xff]
        %v749 = vld [vmem:[%s676 + $0x18] sm:$0xff]
        %v751 = vsel %vm717, %v745, 0
        %753 = vmatprep.subr.mxu0 0.0
        %754 = vmatpush1.msra.mxu0 0.0
        %755 = vmatprep.subr.mxu0 0.0
        %756 = vmatpush1.msra.mxu0 0.0
        %757 = vmatprep.subr.mxu0 0.0
        %758 = vmatpush1.msra.mxu0 0.0
        %759 = vmatprep.subr.mxu0 0.0
        %760 = vmatpush1.msra.mxu0 0.0
        %761 = vmatprep.subr.mxu0 0.0
        %762 = vmatpush1.msra.mxu0 0.0
        %763 = vmatprep.subr.mxu0 0.0
        %764 = vmatpush1.msra.mxu0 0.0
        %765 = vmatprep.subr.mxu0 0.0
        %766 = vmatpush1.msra.mxu0 0.0
        %767 = vmatprep.subr.mxu0 0.0
        %768 = vmatpush1.msra.mxu0 0.0
        %769 = vmatprep.subr.mxu0 0.0
        %770 = vmatpush1.msra.mxu0 0.0
        %771 = vmatprep.subr.mxu0 0.0
        %772 = vmatpush1.msra.mxu0 0.0
        %773 = vmatprep.subr.mxu0 0.0
        %774 = vmatpush1.msra.mxu0 0.0
        %775 = vmatprep.subr.mxu0 0.0
        %776 = vmatpush1.msra.mxu0 0.0
        %777 = vmatprep.subr.mxu0 0.0
        %778 = vmatpush1.msra.mxu0 %v749
        %779 = vmatprep.subr.mxu0 0.0
        %780 = vmatpush1.msra.mxu0 %v748
        %781 = vmatprep.subr.mxu0 0.0
        %782 = vmatpush1.msra.mxu0 %v747
        %783 = vmatprep.subr.mxu0 0.0
        %784 = vmatpush1.msra.mxu0 %v746
        %785 = vmatprep.subr.mxu0 0.0
        %786 = vmatpush2.msra.mxu0 0.0
        %787 = vmatprep.subr.mxu0 0.0
        %788 = vmatpush2.msra.mxu0 0.0
        %789 = vmatprep.subr.mxu0 0.0
        %790 = vmatpush2.msra.mxu0 0.0
        %791 = vmatprep.subr.mxu0 0.0
        %792 = vmatpush2.msra.mxu0 0.0
        %793 = vmatprep.subr.mxu0 0.0
        %794 = vmatpush2.msra.mxu0 0.0
        %795 = vmatprep.subr.mxu0 0.0
        %796 = vmatpush2.msra.mxu0 0.0
        %797 = vmatprep.subr.mxu0 0.0
        %798 = vmatpush2.msra.mxu0 0.0
        %799 = vmatprep.subr.mxu0 0.0
        %800 = vmatpush2.msra.mxu0 0.0
        %801 = vmatprep.subr.mxu0 0.0
        %802 = vmatpush2.msra.mxu0 0.0
        %803 = vmatprep.subr.mxu0 0.0
        %804 = vmatpush2.msra.mxu0 0.0
        %805 = vmatprep.subr.mxu0 0.0
        %806 = vmatpush2.msra.mxu0 0.0
        %807 = vmatprep.subr.mxu0 0.0
        %808 = vmatpush2.msra.mxu0 0.0
        %809 = vmatprep.subr.mxu0 0.0
        %810 = vmatpush2.msra.mxu0 0.0
        %811 = vmatprep.subr.mxu0 0.0
        %812 = vmatpush2.msra.mxu0 0.0
        %813 = vmatprep.subr.mxu0 0.0
        %814 = vmatpush2.msra.mxu0 0.0
        %815 = vmatprep.subr.mxu0 0.0
        %816 = vmatpush2.msra.mxu0 0.0
        %817 = vmatprep.mubr.f32.mxu0 0.0
        %818 = vmatmul.mubr.f32.gmra.mxu0 %v751
        %v819 = vpop.f32.mrf.mxu0
        %v820 = vadd.f32 0.0, %v819
        %v821 = vpop.f32.mrf.mxu0
        %822 = vdwg.mxu0
        %v823 = vlaneseq
        %v824 = vshrl.u32 %v823, 7
        %v825 = vlaneseq
        %v826 = vand.u32 %v825, 127
        %vm827 = vcmp.le.s32.totalorder %v826, %v824
        %829 = vrot.lane.b32.xlu0 %v820, 96
        %v830 = vpop.permute.xlu0 %829
        %vm831 = vcmask 64512
        %v832 = vsel %vm831, %v820, 0
        %v834 = vsel %vm831, %v830, 0
        %836 = vmatprep.subr.mxu0 0.0
        %837 = vmatpush1.xpose.msra.mxu0 0.0
        %838 = vmatprep.subr.mxu0 0.0
        %839 = vmatpush1.xpose.msra.mxu0 0.0
        %840 = vmatprep.subr.mxu0 0.0
        %841 = vmatpush1.xpose.msra.mxu0 0.0
        %842 = vmatprep.subr.mxu0 0.0
        %843 = vmatpush1.xpose.msra.mxu0 0.0
        %844 = vmatprep.subr.mxu0 0.0
        %845 = vmatpush1.xpose.msra.mxu0 0.0
        %846 = vmatprep.subr.mxu0 0.0
        %847 = vmatpush1.xpose.msra.mxu0 0.0
        %848 = vmatprep.subr.mxu0 0.0
        %849 = vmatpush1.xpose.msra.mxu0 0.0
        %850 = vmatprep.subr.mxu0 0.0
        %851 = vmatpush1.xpose.msra.mxu0 0.0
        %852 = vmatprep.subr.mxu0 0.0
        %853 = vmatpush1.xpose.msra.mxu0 0.0
        %854 = vmatprep.subr.mxu0 0.0
        %855 = vmatpush1.xpose.msra.mxu0 0.0
        %856 = vmatprep.subr.mxu0 0.0
        %857 = vmatpush1.xpose.msra.mxu0 0.0
        %858 = vmatprep.subr.mxu0 0.0
        %859 = vmatpush1.xpose.msra.mxu0 0.0
        %860 = vmatprep.subr.mxu0 0.0
        %861 = vmatpush1.xpose.msra.mxu0 0.0
        %862 = vmatprep.subr.mxu0 0.0
        %863 = vmatpush1.xpose.msra.mxu0 0.0
        %864 = vmatprep.subr.mxu0 0.0
        %865 = vmatpush1.xpose.msra.mxu0 0.0
        %866 = vmatprep.subr.mxu0 0.0
        %867 = vmatpush1.xpose.msra.mxu0 %v834
        %868 = vmatprep.subr.mxu0 0.0
        %869 = vmatpush2.xpose.msra.mxu0 0.0
        %870 = vmatprep.subr.mxu0 0.0
        %871 = vmatpush2.xpose.msra.mxu0 0.0
        %872 = vmatprep.subr.mxu0 0.0
        %873 = vmatpush2.xpose.msra.mxu0 0.0
        %874 = vmatprep.subr.mxu0 0.0
        %875 = vmatpush2.xpose.msra.mxu0 0.0
        %876 = vmatprep.subr.mxu0 0.0
        %877 = vmatpush2.xpose.msra.mxu0 0.0
        %878 = vmatprep.subr.mxu0 0.0
        %879 = vmatpush2.xpose.msra.mxu0 0.0
        %880 = vmatprep.subr.mxu0 0.0
        %881 = vmatpush2.xpose.msra.mxu0 0.0
        %882 = vmatprep.subr.mxu0 0.0
        %883 = vmatpush2.xpose.msra.mxu0 0.0
        %884 = vmatprep.subr.mxu0 0.0
        %885 = vmatpush2.xpose.msra.mxu0 0.0
        %886 = vmatprep.subr.mxu0 0.0
        %887 = vmatpush2.xpose.msra.mxu0 0.0
        %888 = vmatprep.subr.mxu0 0.0
        %889 = vmatpush2.xpose.msra.mxu0 0.0
        %890 = vmatprep.subr.mxu0 0.0
        %891 = vmatpush2.xpose.msra.mxu0 0.0
        %892 = vmatprep.subr.mxu0 0.0
        %893 = vmatpush2.xpose.msra.mxu0 0.0
        %894 = vmatprep.subr.mxu0 0.0
        %895 = vmatpush2.xpose.msra.mxu0 0.0
        %896 = vmatprep.subr.mxu0 0.0
        %897 = vmatpush2.xpose.msra.mxu0 0.0
        %898 = vmatprep.subr.mxu0 0.0
        %899 = vmatpush2.xpose.msra.mxu0 0.0
        %900 = vmatprep.mubr.f32.mxu0 0.0
        %901 = vmatmul.mubr.f32.gmra.mxu0 %v832
        %v902 = vpop.f32.mrf.mxu0
        %v903 = vadd.f32 0.0, %v902
        %v904 = vpop.f32.mrf.mxu0
        %905 = vdwg.mxu0
        %v906 = vmul.f32 %v903, 0.35355338
        %v907 = vsel %vm827, %v906, -inf
        %v908 = vsel %vm831, %v907, -inf
        %909 = vmax.xlane.f32.xlu0 %v908
        %v910 = vpop.xlane.xlu0 %909
        %v911 = vsub.f32 %v907, %v910
        %v912 = vmul.f32 %v911, 1.442695
        %v913 = vpow.pop %v912
        %v914 = vsel %vm831, %v913, 0.0
        %915 = vadd.xlane.f32.xlu0 %v914
        %v916 = vpop.xlane.xlu0 %915
        %v917 = vrcp.pop %v916
        %v918 = vmul.f32 %v913, %v917
        %919 = vrot.lane.b32.xlu0 %v820, 64
        %v920 = vpop.permute.xlu0 %919
        %v923 = vsel %vm831, %v918, 0
        %925 = vmatprep.subr.mxu0 0.0
        %926 = vmatpush1.msra.mxu0 0.0
        %927 = vmatprep.subr.mxu0 0.0
        %928 = vmatpush1.msra.mxu0 0.0
        %929 = vmatprep.subr.mxu0 0.0
        %930 = vmatpush1.msra.mxu0 0.0
        %931 = vmatprep.subr.mxu0 0.0
        %932 = vmatpush1.msra.mxu0 0.0
        %933 = vmatprep.subr.mxu0 0.0
        %934 = vmatpush1.msra.mxu0 0.0
        %935 = vmatprep.subr.mxu0 0.0
        %936 = vmatpush1.msra.mxu0 0.0
        %937 = vmatprep.subr.mxu0 0.0
        %938 = vmatpush1.msra.mxu0 0.0
        %939 = vmatprep.subr.mxu0 0.0
        %940 = vmatpush1.msra.mxu0 0.0
        %941 = vmatprep.subr.mxu0 0.0
        %942 = vmatpush1.msra.mxu0 0.0
        %943 = vmatprep.subr.mxu0 0.0
        %944 = vmatpush1.msra.mxu0 0.0
        %945 = vmatprep.subr.mxu0 0.0
        %946 = vmatpush1.msra.mxu0 0.0
        %947 = vmatprep.subr.mxu0 0.0
        %948 = vmatpush1.msra.mxu0 0.0
        %949 = vmatprep.subr.mxu0 0.0
        %950 = vmatpush1.msra.mxu0 0.0
        %951 = vmatprep.subr.mxu0 0.0
        %952 = vmatpush1.msra.mxu0 0.0
        %953 = vmatprep.subr.mxu0 0.0
        %954 = vmatpush1.msra.mxu0 0.0
        %955 = vmatprep.subr.mxu0 0.0
        %956 = vmatpush1.msra.mxu0 %v920
        %957 = vmatprep.subr.mxu0 0.0
        %958 = vmatpush2.msra.mxu0 0.0
        %959 = vmatprep.subr.mxu0 0.0
        %960 = vmatpush2.msra.mxu0 0.0
        %961 = vmatprep.subr.mxu0 0.0
        %962 = vmatpush2.msra.mxu0 0.0
        %963 = vmatprep.subr.mxu0 0.0
        %964 = vmatpush2.msra.mxu0 0.0
        %965 = vmatprep.subr.mxu0 0.0
        %966 = vmatpush2.msra.mxu0 0.0
        %967 = vmatprep.subr.mxu0 0.0
        %968 = vmatpush2.msra.mxu0 0.0
        %969 = vmatprep.subr.mxu0 0.0
        %970 = vmatpush2.msra.mxu0 0.0
        %971 = vmatprep.subr.mxu0 0.0
        %972 = vmatpush2.msra.mxu0 0.0
        %973 = vmatprep.subr.mxu0 0.0
        %974 = vmatpush2.msra.mxu0 0.0
        %975 = vmatprep.subr.mxu0 0.0
        %976 = vmatpush2.msra.mxu0 0.0
        %977 = vmatprep.subr.mxu0 0.0
        %978 = vmatpush2.msra.mxu0 0.0
        %979 = vmatprep.subr.mxu0 0.0
        %980 = vmatpush2.msra.mxu0 0.0
        %981 = vmatprep.subr.mxu0 0.0
        %982 = vmatpush2.msra.mxu0 0.0
        %983 = vmatprep.subr.mxu0 0.0
        %984 = vmatpush2.msra.mxu0 0.0
        %985 = vmatprep.subr.mxu0 0.0
        %986 = vmatpush2.msra.mxu0 0.0
        %987 = vmatprep.subr.mxu0 0.0
        %988 = vmatpush2.msra.mxu0 0.0
        %989 = vmatprep.mubr.f32.mxu0 0.0
        %990 = vmatmul.mubr.f32.gmra.mxu0 %v923
        %v991 = vpop.f32.mrf.mxu0
        %v992 = vadd.f32 0.0, %v991
        %v993 = vpop.f32.mrf.mxu0
        %994 = vdwg.mxu0
        %995 = vrot.lane.b32.xlu0 %v820, 120
        %v996 = vpop.permute.xlu0 %995
        %997 = vrot.lane.b32.xlu0 %v820, 88
        %v998 = vpop.permute.xlu0 %997
        %v999 = vsel %vm831, %v996, 0
        %v1001 = vsel %vm831, %v998, 0
        %1003 = vmatprep.subr.mxu0 0.0
        %1004 = vmatpush1.xpose.msra.mxu0 0.0
        %1005 = vmatprep.subr.mxu0 0.0
        %1006 = vmatpush1.xpose.msra.mxu0 0.0
        %1007 = vmatprep.subr.mxu0 0.0
        %1008 = vmatpush1.xpose.msra.mxu0 0.0
        %1009 = vmatprep.subr.mxu0 0.0
        %1010 = vmatpush1.xpose.msra.mxu0 0.0
        %1011 = vmatprep.subr.mxu0 0.0
        %1012 = vmatpush1.xpose.msra.mxu0 0.0
        %1013 = vmatprep.subr.mxu0 0.0
        %1014 = vmatpush1.xpose.msra.mxu0 0.0
        %1015 = vmatprep.subr.mxu0 0.0
        %1016 = vmatpush1.xpose.msra.mxu0 0.0
        %1017 = vmatprep.subr.mxu0 0.0
        %1018 = vmatpush1.xpose.msra.mxu0 0.0
        %1019 = vmatprep.subr.mxu0 0.0
        %1020 = vmatpush1.xpose.msra.mxu0 0.0
        %1021 = vmatprep.subr.mxu0 0.0
        %1022 = vmatpush1.xpose.msra.mxu0 0.0
        %1023 = vmatprep.subr.mxu0 0.0
        %1024 = vmatpush1.xpose.msra.mxu0 0.0
        %1025 = vmatprep.subr.mxu0 0.0
        %1026 = vmatpush1.xpose.msra.mxu0 0.0
        %1027 = vmatprep.subr.mxu0 0.0
        %1028 = vmatpush1.xpose.msra.mxu0 0.0
        %1029 = vmatprep.subr.mxu0 0.0
        %1030 = vmatpush1.xpose.msra.mxu0 0.0
        %1031 = vmatprep.subr.mxu0 0.0
        %1032 = vmatpush1.xpose.msra.mxu0 0.0
        %1033 = vmatprep.subr.mxu0 0.0
        %1034 = vmatpush1.xpose.msra.mxu0 %v1001
        %1035 = vmatprep.subr.mxu0 0.0
        %1036 = vmatpush2.xpose.msra.mxu0 0.0
        %1037 = vmatprep.subr.mxu0 0.0
        %1038 = vmatpush2.xpose.msra.mxu0 0.0
        %1039 = vmatprep.subr.mxu0 0.0
        %1040 = vmatpush2.xpose.msra.mxu0 0.0
        %1041 = vmatprep.subr.mxu0 0.0
        %1042 = vmatpush2.xpose.msra.mxu0 0.0
        %1043 = vmatprep.subr.mxu0 0.0
        %1044 = vmatpush2.xpose.msra.mxu0 0.0
        %1045 = vmatprep.subr.mxu0 0.0
        %1046 = vmatpush2.xpose.msra.mxu0 0.0
        %1047 = vmatprep.subr.mxu0 0.0
        %1048 = vmatpush2.xpose.msra.mxu0 0.0
        %1049 = vmatprep.subr.mxu0 0.0
        %1050 = vmatpush2.xpose.msra.mxu0 0.0
        %1051 = vmatprep.subr.mxu0 0.0
        %1052 = vmatpush2.xpose.msra.mxu0 0.0
        %1053 = vmatprep.subr.mxu0 0.0
        %1054 = vmatpush2.xpose.msra.mxu0 0.0
        %1055 = vmatprep.subr.mxu0 0.0
        %1056 = vmatpush2.xpose.msra.mxu0 0.0
        %1057 = vmatprep.subr.mxu0 0.0
        %1058 = vmatpush2.xpose.msra.mxu0 0.0
        %1059 = vmatprep.subr.mxu0 0.0
        %1060 = vmatpush2.xpose.msra.mxu0 0.0
        %1061 = vmatprep.subr.mxu0 0.0
        %1062 = vmatpush2.xpose.msra.mxu0 0.0
        %1063 = vmatprep.subr.mxu0 0.0
        %1064 = vmatpush2.xpose.msra.mxu0 0.0
        %1065 = vmatprep.subr.mxu0 0.0
        %1066 = vmatpush2.xpose.msra.mxu0 0.0
        %1067 = vmatprep.mubr.f32.mxu0 0.0
        %1068 = vmatmul.mubr.f32.gmra.mxu0 %v999
        %v1069 = vpop.f32.mrf.mxu0
        %v1070 = vadd.f32 0.0, %v1069
        %v1071 = vpop.f32.mrf.mxu0
        %1072 = vdwg.mxu0
        %v1073 = vmul.f32 %v1070, 0.35355338
        %v1074 = vsel %vm827, %v1073, -inf
        %v1075 = vsel %vm831, %v1074, -inf
        %1076 = vmax.xlane.f32.xlu0 %v1075
        %v1077 = vpop.xlane.xlu0 %1076
        %v1078 = vsub.f32 %v1074, %v1077
        %v1079 = vmul.f32 %v1078, 1.442695
        %v1080 = vpow.pop %v1079
        %v1081 = vsel %vm831, %v1080, 0.0
        %1082 = vadd.xlane.f32.xlu0 %v1081
        %v1083 = vpop.xlane.xlu0 %1082
        %v1084 = vrcp.pop %v1083
        %v1085 = vmul.f32 %v1080, %v1084
        %1086 = vrot.lane.b32.xlu0 %v820, 56
        %v1087 = vpop.permute.xlu0 %1086
        %v1090 = vsel %vm831, %v1085, 0
        %1092 = vmatprep.subr.mxu0 0.0
        %1093 = vmatpush1.msra.mxu0 0.0
        %1094 = vmatprep.subr.mxu0 0.0
        %1095 = vmatpush1.msra.mxu0 0.0
        %1096 = vmatprep.subr.mxu0 0.0
        %1097 = vmatpush1.msra.mxu0 0.0
        %1098 = vmatprep.subr.mxu0 0.0
        %1099 = vmatpush1.msra.mxu0 0.0
        %1100 = vmatprep.subr.mxu0 0.0
        %1101 = vmatpush1.msra.mxu0 0.0
        %1102 = vmatprep.subr.mxu0 0.0
        %1103 = vmatpush1.msra.mxu0 0.0
        %1104 = vmatprep.subr.mxu0 0.0
        %1105 = vmatpush1.msra.mxu0 0.0
        %1106 = vmatprep.subr.mxu0 0.0
        %1107 = vmatpush1.msra.mxu0 0.0
        %1108 = vmatprep.subr.mxu0 0.0
        %1109 = vmatpush1.msra.mxu0 0.0
        %1110 = vmatprep.subr.mxu0 0.0
        %1111 = vmatpush1.msra.mxu0 0.0
        %1112 = vmatprep.subr.mxu0 0.0
        %1113 = vmatpush1.msra.mxu0 0.0
        %1114 = vmatprep.subr.mxu0 0.0
        %1115 = vmatpush1.msra.mxu0 0.0
        %1116 = vmatprep.subr.mxu0 0.0
        %1117 = vmatpush1.msra.mxu0 0.0
        %1118 = vmatprep.subr.mxu0 0.0
        %1119 = vmatpush1.msra.mxu0 0.0
        %1120 = vmatprep.subr.mxu0 0.0
        %1121 = vmatpush1.msra.mxu0 0.0
        %1122 = vmatprep.subr.mxu0 0.0
        %1123 = vmatpush1.msra.mxu0 %v1087
        %1124 = vmatprep.subr.mxu0 0.0
        %1125 = vmatpush2.msra.mxu0 0.0
        %1126 = vmatprep.subr.mxu0 0.0
        %1127 = vmatpush2.msra.mxu0 0.0
        %1128 = vmatprep.subr.mxu0 0.0
        %1129 = vmatpush2.msra.mxu0 0.0
        %1130 = vmatprep.subr.mxu0 0.0
        %1131 = vmatpush2.msra.mxu0 0.0
        %1132 = vmatprep.subr.mxu0 0.0
        %1133 = vmatpush2.msra.mxu0 0.0
        %1134 = vmatprep.subr.mxu0 0.0
        %1135 = vmatpush2.msra.mxu0 0.0
        %1136 = vmatprep.subr.mxu0 0.0
        %1137 = vmatpush2.msra.mxu0 0.0
        %1138 = vmatprep.subr.mxu0 0.0
        %1139 = vmatpush2.msra.mxu0 0.0
        %1140 = vmatprep.subr.mxu0 0.0
        %1141 = vmatpush2.msra.mxu0 0.0
        %1142 = vmatprep.subr.mxu0 0.0
        %1143 = vmatpush2.msra.mxu0 0.0
        %1144 = vmatprep.subr.mxu0 0.0
        %1145 = vmatpush2.msra.mxu0 0.0
        %1146 = vmatprep.subr.mxu0 0.0
        %1147 = vmatpush2.msra.mxu0 0.0
        %1148 = vmatprep.subr.mxu0 0.0
        %1149 = vmatpush2.msra.mxu0 0.0
        %1150 = vmatprep.subr.mxu0 0.0
        %1151 = vmatpush2.msra.mxu0 0.0
        %1152 = vmatprep.subr.mxu0 0.0
        %1153 = vmatpush2.msra.mxu0 0.0
        %1154 = vmatprep.subr.mxu0 0.0
        %1155 = vmatpush2.msra.mxu0 0.0
        %1156 = vmatprep.mubr.f32.mxu0 0.0
        %1157 = vmatmul.mubr.f32.gmra.mxu0 %v1090
        %v1158 = vpop.f32.mrf.mxu0
        %v1159 = vadd.f32 0.0, %v1158
        %v1160 = vpop.f32.mrf.mxu0
        %1161 = vdwg.mxu0
        %1162 = vrot.lane.b32.xlu0 %v820, 112
        %v1163 = vpop.permute.xlu0 %1162
        %1164 = vrot.lane.b32.xlu0 %v820, 80
        %v1165 = vpop.permute.xlu0 %1164
        %v1166 = vsel %vm831, %v1163, 0
        %v1168 = vsel %vm831, %v1165, 0
        %1170 = vmatprep.subr.mxu0 0.0
        %1171 = vmatpush1.xpose.msra.mxu0 0.0
        %1172 = vmatprep.subr.mxu0 0.0
        %1173 = vmatpush1.xpose.msra.mxu0 0.0
        %1174 = vmatprep.subr.mxu0 0.0
        %1175 = vmatpush1.xpose.msra.mxu0 0.0
        %1176 = vmatprep.subr.mxu0 0.0
        %1177 = vmatpush1.xpose.msra.mxu0 0.0
        %1178 = vmatprep.subr.mxu0 0.0
        %1179 = vmatpush1.xpose.msra.mxu0 0.0
        %1180 = vmatprep.subr.mxu0 0.0
        %1181 = vmatpush1.xpose.msra.mxu0 0.0
        %1182 = vmatprep.subr.mxu0 0.0
        %1183 = vmatpush1.xpose.msra.mxu0 0.0
        %1184 = vmatprep.subr.mxu0 0.0
        %1185 = vmatpush1.xpose.msra.mxu0 0.0
        %1186 = vmatprep.subr.mxu0 0.0
        %1187 = vmatpush1.xpose.msra.mxu0 0.0
        %1188 = vmatprep.subr.mxu0 0.0
        %1189 = vmatpush1.xpose.msra.mxu0 0.0
        %1190 = vmatprep.subr.mxu0 0.0
        %1191 = vmatpush1.xpose.msra.mxu0 0.0
        %1192 = vmatprep.subr.mxu0 0.0
        %1193 = vmatpush1.xpose.msra.mxu0 0.0
        %1194 = vmatprep.subr.mxu0 0.0
        %1195 = vmatpush1.xpose.msra.mxu0 0.0
        %1196 = vmatprep.subr.mxu0 0.0
        %1197 = vmatpush1.xpose.msra.mxu0 0.0
        %1198 = vmatprep.subr.mxu0 0.0
        %1199 = vmatpush1.xpose.msra.mxu0 0.0
        %1200 = vmatprep.subr.mxu0 0.0
        %1201 = vmatpush1.xpose.msra.mxu0 %v1168
        %1202 = vmatprep.subr.mxu0 0.0
        %1203 = vmatpush2.xpose.msra.mxu0 0.0
        %1204 = vmatprep.subr.mxu0 0.0
        %1205 = vmatpush2.xpose.msra.mxu0 0.0
        %1206 = vmatprep.subr.mxu0 0.0
        %1207 = vmatpush2.xpose.msra.mxu0 0.0
        %1208 = vmatprep.subr.mxu0 0.0
        %1209 = vmatpush2.xpose.msra.mxu0 0.0
        %1210 = vmatprep.subr.mxu0 0.0
        %1211 = vmatpush2.xpose.msra.mxu0 0.0
        %1212 = vmatprep.subr.mxu0 0.0
        %1213 = vmatpush2.xpose.msra.mxu0 0.0
        %1214 = vmatprep.subr.mxu0 0.0
        %1215 = vmatpush2.xpose.msra.mxu0 0.0
        %1216 = vmatprep.subr.mxu0 0.0
        %1217 = vmatpush2.xpose.msra.mxu0 0.0
        %1218 = vmatprep.subr.mxu0 0.0
        %1219 = vmatpush2.xpose.msra.mxu0 0.0
        %1220 = vmatprep.subr.mxu0 0.0
        %1221 = vmatpush2.xpose.msra.mxu0 0.0
        %1222 = vmatprep.subr.mxu0 0.0
        %1223 = vmatpush2.xpose.msra.mxu0 0.0
        %1224 = vmatprep.subr.mxu0 0.0
        %1225 = vmatpush2.xpose.msra.mxu0 0.0
        %1226 = vmatprep.subr.mxu0 0.0
        %1227 = vmatpush2.xpose.msra.mxu0 0.0
        %1228 = vmatprep.subr.mxu0 0.0
        %1229 = vmatpush2.xpose.msra.mxu0 0.0
        %1230 = vmatprep.subr.mxu0 0.0
        %1231 = vmatpush2.xpose.msra.mxu0 0.0
        %1232 = vmatprep.subr.mxu0 0.0
        %1233 = vmatpush2.xpose.msra.mxu0 0.0
        %1234 = vmatprep.mubr.f32.mxu0 0.0
        %1235 = vmatmul.mubr.f32.gmra.mxu0 %v1166
        %v1236 = vpop.f32.mrf.mxu0
        %v1237 = vadd.f32 0.0, %v1236
        %v1238 = vpop.f32.mrf.mxu0
        %1239 = vdwg.mxu0
        %v1240 = vmul.f32 %v1237, 0.35355338
        %v1241 = vsel %vm827, %v1240, -inf
        %v1242 = vsel %vm831, %v1241, -inf
        %1243 = vmax.xlane.f32.xlu0 %v1242
        %v1244 = vpop.xlane.xlu0 %1243
        %v1245 = vsub.f32 %v1241, %v1244
        %v1246 = vmul.f32 %v1245, 1.442695
        %v1247 = vpow.pop %v1246
        %v1248 = vsel %vm831, %v1247, 0.0
        %1249 = vadd.xlane.f32.xlu0 %v1248
        %v1250 = vpop.xlane.xlu0 %1249
        %v1251 = vrcp.pop %v1250
        %v1252 = vmul.f32 %v1247, %v1251
        %1253 = vrot.lane.b32.xlu0 %v820, 48
        %v1254 = vpop.permute.xlu0 %1253
        %v1257 = vsel %vm831, %v1252, 0
        %1259 = vmatprep.subr.mxu0 0.0
        %1260 = vmatpush1.msra.mxu0 0.0
        %1261 = vmatprep.subr.mxu0 0.0
        %1262 = vmatpush1.msra.mxu0 0.0
        %1263 = vmatprep.subr.mxu0 0.0
        %1264 = vmatpush1.msra.mxu0 0.0
        %1265 = vmatprep.subr.mxu0 0.0
        %1266 = vmatpush1.msra.mxu0 0.0
        %1267 = vmatprep.subr.mxu0 0.0
        %1268 = vmatpush1.msra.mxu0 0.0
        %1269 = vmatprep.subr.mxu0 0.0
        %1270 = vmatpush1.msra.mxu0 0.0
        %1271 = vmatprep.subr.mxu0 0.0
        %1272 = vmatpush1.msra.mxu0 0.0
        %1273 = vmatprep.subr.mxu0 0.0
        %1274 = vmatpush1.msra.mxu0 0.0
        %1275 = vmatprep.subr.mxu0 0.0
        %1276 = vmatpush1.msra.mxu0 0.0
        %1277 = vmatprep.subr.mxu0 0.0
        %1278 = vmatpush1.msra.mxu0 0.0
        %1279 = vmatprep.subr.mxu0 0.0
        %1280 = vmatpush1.msra.mxu0 0.0
        %1281 = vmatprep.subr.mxu0 0.0
        %1282 = vmatpush1.msra.mxu0 0.0
        %1283 = vmatprep.subr.mxu0 0.0
        %1284 = vmatpush1.msra.mxu0 0.0
        %1285 = vmatprep.subr.mxu0 0.0
        %1286 = vmatpush1.msra.mxu0 0.0
        %1287 = vmatprep.subr.mxu0 0.0
        %1288 = vmatpush1.msra.mxu0 0.0
        %1289 = vmatprep.subr.mxu0 0.0
        %1290 = vmatpush1.msra.mxu0 %v1254
        %1291 = vmatprep.subr.mxu0 0.0
        %1292 = vmatpush2.msra.mxu0 0.0
        %1293 = vmatprep.subr.mxu0 0.0
        %1294 = vmatpush2.msra.mxu0 0.0
        %1295 = vmatprep.subr.mxu0 0.0
        %1296 = vmatpush2.msra.mxu0 0.0
        %1297 = vmatprep.subr.mxu0 0.0
        %1298 = vmatpush2.msra.mxu0 0.0
        %1299 = vmatprep.subr.mxu0 0.0
        %1300 = vmatpush2.msra.mxu0 0.0
        %1301 = vmatprep.subr.mxu0 0.0
        %1302 = vmatpush2.msra.mxu0 0.0
        %1303 = vmatprep.subr.mxu0 0.0
        %1304 = vmatpush2.msra.mxu0 0.0
        %1305 = vmatprep.subr.mxu0 0.0
        %1306 = vmatpush2.msra.mxu0 0.0
        %1307 = vmatprep.subr.mxu0 0.0
        %1308 = vmatpush2.msra.mxu0 0.0
        %1309 = vmatprep.subr.mxu0 0.0
        %1310 = vmatpush2.msra.mxu0 0.0
        %1311 = vmatprep.subr.mxu0 0.0
        %1312 = vmatpush2.msra.mxu0 0.0
        %1313 = vmatprep.subr.mxu0 0.0
        %1314 = vmatpush2.msra.mxu0 0.0
        %1315 = vmatprep.subr.mxu0 0.0
        %1316 = vmatpush2.msra.mxu0 0.0
        %1317 = vmatprep.subr.mxu0 0.0
        %1318 = vmatpush2.msra.mxu0 0.0
        %1319 = vmatprep.subr.mxu0 0.0
        %1320 = vmatpush2.msra.mxu0 0.0
        %1321 = vmatprep.subr.mxu0 0.0
        %1322 = vmatpush2.msra.mxu0 0.0
        %1323 = vmatprep.mubr.f32.mxu0 0.0
        %1324 = vmatmul.mubr.f32.gmra.mxu0 %v1257
        %v1325 = vpop.f32.mrf.mxu0
        %v1326 = vadd.f32 0.0, %v1325
        %v1327 = vpop.f32.mrf.mxu0
        %1328 = vdwg.mxu0
        %1329 = vrot.lane.b32.xlu0 %v820, 104
        %v1330 = vpop.permute.xlu0 %1329
        %1331 = vrot.lane.b32.xlu0 %v820, 72
        %v1332 = vpop.permute.xlu0 %1331
        %v1333 = vsel %vm831, %v1330, 0
        %v1335 = vsel %vm831, %v1332, 0
        %1337 = vmatprep.subr.mxu0 0.0
        %1338 = vmatpush1.xpose.msra.mxu0 0.0
        %1339 = vmatprep.subr.mxu0 0.0
        %1340 = vmatpush1.xpose.msra.mxu0 0.0
        %1341 = vmatprep.subr.mxu0 0.0
        %1342 = vmatpush1.xpose.msra.mxu0 0.0
        %1343 = vmatprep.subr.mxu0 0.0
        %1344 = vmatpush1.xpose.msra.mxu0 0.0
        %1345 = vmatprep.subr.mxu0 0.0
        %1346 = vmatpush1.xpose.msra.mxu0 0.0
        %1347 = vmatprep.subr.mxu0 0.0
        %1348 = vmatpush1.xpose.msra.mxu0 0.0
        %1349 = vmatprep.subr.mxu0 0.0
        %1350 = vmatpush1.xpose.msra.mxu0 0.0
        %1351 = vmatprep.subr.mxu0 0.0
        %1352 = vmatpush1.xpose.msra.mxu0 0.0
        %1353 = vmatprep.subr.mxu0 0.0
        %1354 = vmatpush1.xpose.msra.mxu0 0.0
        %1355 = vmatprep.subr.mxu0 0.0
        %1356 = vmatpush1.xpose.msra.mxu0 0.0
        %1357 = vmatprep.subr.mxu0 0.0
        %1358 = vmatpush1.xpose.msra.mxu0 0.0
        %1359 = vmatprep.subr.mxu0 0.0
        %1360 = vmatpush1.xpose.msra.mxu0 0.0
        %1361 = vmatprep.subr.mxu0 0.0
        %1362 = vmatpush1.xpose.msra.mxu0 0.0
        %1363 = vmatprep.subr.mxu0 0.0
        %1364 = vmatpush1.xpose.msra.mxu0 0.0
        %1365 = vmatprep.subr.mxu0 0.0
        %1366 = vmatpush1.xpose.msra.mxu0 0.0
        %1367 = vmatprep.subr.mxu0 0.0
        %1368 = vmatpush1.xpose.msra.mxu0 %v1335
        %1369 = vmatprep.subr.mxu0 0.0
        %1370 = vmatpush2.xpose.msra.mxu0 0.0
        %1371 = vmatprep.subr.mxu0 0.0
        %1372 = vmatpush2.xpose.msra.mxu0 0.0
        %1373 = vmatprep.subr.mxu0 0.0
        %1374 = vmatpush2.xpose.msra.mxu0 0.0
        %1375 = vmatprep.subr.mxu0 0.0
        %1376 = vmatpush2.xpose.msra.mxu0 0.0
        %1377 = vmatprep.subr.mxu0 0.0
        %1378 = vmatpush2.xpose.msra.mxu0 0.0
        %1379 = vmatprep.subr.mxu0 0.0
        %1380 = vmatpush2.xpose.msra.mxu0 0.0
        %1381 = vmatprep.subr.mxu0 0.0
        %1382 = vmatpush2.xpose.msra.mxu0 0.0
        %1383 = vmatprep.subr.mxu0 0.0
        %1384 = vmatpush2.xpose.msra.mxu0 0.0
        %1385 = vmatprep.subr.mxu0 0.0
        %1386 = vmatpush2.xpose.msra.mxu0 0.0
        %1387 = vmatprep.subr.mxu0 0.0
        %1388 = vmatpush2.xpose.msra.mxu0 0.0
        %1389 = vmatprep.subr.mxu0 0.0
        %1390 = vmatpush2.xpose.msra.mxu0 0.0
        %1391 = vmatprep.subr.mxu0 0.0
        %1392 = vmatpush2.xpose.msra.mxu0 0.0
        %1393 = vmatprep.subr.mxu0 0.0
        %1394 = vmatpush2.xpose.msra.mxu0 0.0
        %1395 = vmatprep.subr.mxu0 0.0
        %1396 = vmatpush2.xpose.msra.mxu0 0.0
        %1397 = vmatprep.subr.mxu0 0.0
        %1398 = vmatpush2.xpose.msra.mxu0 0.0
        %1399 = vmatprep.subr.mxu0 0.0
        %1400 = vmatpush2.xpose.msra.mxu0 0.0
        %1401 = vmatprep.mubr.f32.mxu0 0.0
        %1402 = vmatmul.mubr.f32.gmra.mxu0 %v1333
        %v1403 = vpop.f32.mrf.mxu0
        %v1404 = vadd.f32 0.0, %v1403
        %v1405 = vpop.f32.mrf.mxu0
        %1406 = vdwg.mxu0
        %v1407 = vmul.f32 %v1404, 0.35355338
        %v1408 = vsel %vm827, %v1407, -inf
        %v1409 = vsel %vm831, %v1408, -inf
        %1410 = vmax.xlane.f32.xlu0 %v1409
        %v1411 = vpop.xlane.xlu0 %1410
        %v1412 = vsub.f32 %v1408, %v1411
        %v1413 = vmul.f32 %v1412, 1.442695
        %v1414 = vpow.pop %v1413
        %v1415 = vsel %vm831, %v1414, 0.0
        %1416 = vadd.xlane.f32.xlu0 %v1415
        %v1417 = vpop.xlane.xlu0 %1416
        %v1418 = vrcp.pop %v1417
        %v1419 = vmul.f32 %v1414, %v1418
        %1420 = vrot.lane.b32.xlu0 %v820, 40
        %v1421 = vpop.permute.xlu0 %1420
        %v1424 = vsel %vm831, %v1419, 0
        %1426 = vmatprep.subr.mxu0 0.0
        %1427 = vmatpush1.msra.mxu0 0.0
        %1428 = vmatprep.subr.mxu0 0.0
        %1429 = vmatpush1.msra.mxu0 0.0
        %1430 = vmatprep.subr.mxu0 0.0
        %1431 = vmatpush1.msra.mxu0 0.0
        %1432 = vmatprep.subr.mxu0 0.0
        %1433 = vmatpush1.msra.mxu0 0.0
        %1434 = vmatprep.subr.mxu0 0.0
        %1435 = vmatpush1.msra.mxu0 0.0
        %1436 = vmatprep.subr.mxu0 0.0
        %1437 = vmatpush1.msra.mxu0 0.0
        %1438 = vmatprep.subr.mxu0 0.0
        %1439 = vmatpush1.msra.mxu0 0.0
        %1440 = vmatprep.subr.mxu0 0.0
        %1441 = vmatpush1.msra.mxu0 0.0
        %1442 = vmatprep.subr.mxu0 0.0
        %1443 = vmatpush1.msra.mxu0 0.0
        %1444 = vmatprep.subr.mxu0 0.0
        %1445 = vmatpush1.msra.mxu0 0.0
        %1446 = vmatprep.subr.mxu0 0.0
        %1447 = vmatpush1.msra.mxu0 0.0
        %1448 = vmatprep.subr.mxu0 0.0
        %1449 = vmatpush1.msra.mxu0 0.0
        %1450 = vmatprep.subr.mxu0 0.0
        %1451 = vmatpush1.msra.mxu0 0.0
        %1452 = vmatprep.subr.mxu0 0.0
        %1453 = vmatpush1.msra.mxu0 0.0
        %1454 = vmatprep.subr.mxu0 0.0
        %1455 = vmatpush1.msra.mxu0 0.0
        %1456 = vmatprep.subr.mxu0 0.0
        %1457 = vmatpush1.msra.mxu0 %v1421
        %1458 = vmatprep.subr.mxu0 0.0
        %1459 = vmatpush2.msra.mxu0 0.0
        %1460 = vmatprep.subr.mxu0 0.0
        %1461 = vmatpush2.msra.mxu0 0.0
        %1462 = vmatprep.subr.mxu0 0.0
        %1463 = vmatpush2.msra.mxu0 0.0
        %1464 = vmatprep.subr.mxu0 0.0
        %1465 = vmatpush2.msra.mxu0 0.0
        %1466 = vmatprep.subr.mxu0 0.0
        %1467 = vmatpush2.msra.mxu0 0.0
        %1468 = vmatprep.subr.mxu0 0.0
        %1469 = vmatpush2.msra.mxu0 0.0
        %1470 = vmatprep.subr.mxu0 0.0
        %1471 = vmatpush2.msra.mxu0 0.0
        %1472 = vmatprep.subr.mxu0 0.0
        %1473 = vmatpush2.msra.mxu0 0.0
        %1474 = vmatprep.subr.mxu0 0.0
        %1475 = vmatpush2.msra.mxu0 0.0
        %1476 = vmatprep.subr.mxu0 0.0
        %1477 = vmatpush2.msra.mxu0 0.0
        %1478 = vmatprep.subr.mxu0 0.0
        %1479 = vmatpush2.msra.mxu0 0.0
        %1480 = vmatprep.subr.mxu0 0.0
        %1481 = vmatpush2.msra.mxu0 0.0
        %1482 = vmatprep.subr.mxu0 0.0
        %1483 = vmatpush2.msra.mxu0 0.0
        %1484 = vmatprep.subr.mxu0 0.0
        %1485 = vmatpush2.msra.mxu0 0.0
        %1486 = vmatprep.subr.mxu0 0.0
        %1487 = vmatpush2.msra.mxu0 0.0
        %1488 = vmatprep.subr.mxu0 0.0
        %1489 = vmatpush2.msra.mxu0 0.0
        %1490 = vmatprep.mubr.f32.mxu0 0.0
        %1491 = vmatmul.mubr.f32.gmra.mxu0 %v1424
        %v1492 = vpop.f32.mrf.mxu0
        %v1493 = vadd.f32 0.0, %v1492
        %v1494 = vpop.f32.mrf.mxu0
        %1495 = vdwg.mxu0
        %1497 = vrot.lane.b32.xlu0 %v1159, 8
        %v1498 = vpop.permute.xlu0 %1497
        %1501 = vrot.lane.b32.xlu0 %v1326, 16
        %v1502 = vpop.permute.xlu0 %1501
        %1505 = vrot.lane.b32.xlu0 %v1493, 24
        %v1506 = vpop.permute.xlu0 %1505
        %v1508 = vsel %vm831, %v992, %v1498
        %vm1509 = vcmask 130048
        %v1510 = vsel %vm1509, %v1508, %v1502
        %vm1511 = vcmask 195584
        %v1512 = vsel %vm1511, %v1510, %v1506
        %v1513 = vld [vmem:[%s681] sm:$0xff]
        %v1514 = vld [vmem:[%s681 + $0x8] sm:$0xff]
        %v1515 = vld [vmem:[%s681 + $0x10] sm:$0xff]
        %v1516 = vld [vmem:[%s681 + $0x18] sm:$0xff]
        %v1517 = vld [vmem:[%s684] sm:$0x1]
        %v1519 = vlaneseq
        %v1520 = vshrl.u32 %v1519, 7
        %v1521 = vsub.s32 0, %v1520
        %v1522 = vrot.slane %v1517, %v1521
        %v1525 = vsel %vm717, %v1512, 0
        %1527 = vmatprep.subr.mxu0 0.0
        %1528 = vmatpush1.msra.mxu0 0.0
        %1529 = vmatprep.subr.mxu0 0.0
        %1530 = vmatpush1.msra.mxu0 0.0
        %1531 = vmatprep.subr.mxu0 0.0
        %1532 = vmatpush1.msra.mxu0 0.0
        %1533 = vmatprep.subr.mxu0 0.0
        %1534 = vmatpush1.msra.mxu0 0.0
        %1535 = vmatprep.subr.mxu0 0.0
        %1536 = vmatpush1.msra.mxu0 0.0
        %1537 = vmatprep.subr.mxu0 0.0
        %1538 = vmatpush1.msra.mxu0 0.0
        %1539 = vmatprep.subr.mxu0 0.0
        %1540 = vmatpush1.msra.mxu0 0.0
        %1541 = vmatprep.subr.mxu0 0.0
        %1542 = vmatpush1.msra.mxu0 0.0
        %1543 = vmatprep.subr.mxu0 0.0
        %1544 = vmatpush1.msra.mxu0 0.0
        %1545 = vmatprep.subr.mxu0 0.0
        %1546 = vmatpush1.msra.mxu0 0.0
        %1547 = vmatprep.subr.mxu0 0.0
        %1548 = vmatpush1.msra.mxu0 0.0
        %1549 = vmatprep.subr.mxu0 0.0
        %1550 = vmatpush1.msra.mxu0 0.0
        %1551 = vmatprep.subr.mxu0 0.0
        %1552 = vmatpush1.msra.mxu0 %v1516
        %1553 = vmatprep.subr.mxu0 0.0
        %1554 = vmatpush1.msra.mxu0 %v1515
        %1555 = vmatprep.subr.mxu0 0.0
        %1556 = vmatpush1.msra.mxu0 %v1514
        %1557 = vmatprep.subr.mxu0 0.0
        %1558 = vmatpush1.msra.mxu0 %v1513
        %1559 = vmatprep.subr.mxu0 0.0
        %1560 = vmatpush2.msra.mxu0 0.0
        %1561 = vmatprep.subr.mxu0 0.0
        %1562 = vmatpush2.msra.mxu0 0.0
        %1563 = vmatprep.subr.mxu0 0.0
        %1564 = vmatpush2.msra.mxu0 0.0
        %1565 = vmatprep.subr.mxu0 0.0
        %1566 = vmatpush2.msra.mxu0 0.0
        %1567 = vmatprep.subr.mxu0 0.0
        %1568 = vmatpush2.msra.mxu0 0.0
        %1569 = vmatprep.subr.mxu0 0.0
        %1570 = vmatpush2.msra.mxu0 0.0
        %1571 = vmatprep.subr.mxu0 0.0
        %1572 = vmatpush2.msra.mxu0 0.0
        %1573 = vmatprep.subr.mxu0 0.0
        %1574 = vmatpush2.msra.mxu0 0.0
        %1575 = vmatprep.subr.mxu0 0.0
        %1576 = vmatpush2.msra.mxu0 0.0
        %1577 = vmatprep.subr.mxu0 0.0
        %1578 = vmatpush2.msra.mxu0 0.0
        %1579 = vmatprep.subr.mxu0 0.0
        %1580 = vmatpush2.msra.mxu0 0.0
        %1581 = vmatprep.subr.mxu0 0.0
        %1582 = vmatpush2.msra.mxu0 0.0
        %1583 = vmatprep.subr.mxu0 0.0
        %1584 = vmatpush2.msra.mxu0 0.0
        %1585 = vmatprep.subr.mxu0 0.0
        %1586 = vmatpush2.msra.mxu0 0.0
        %1587 = vmatprep.subr.mxu0 0.0
        %1588 = vmatpush2.msra.mxu0 0.0
        %1589 = vmatprep.subr.mxu0 0.0
        %1590 = vmatpush2.msra.mxu0 0.0
        %1591 = vmatprep.mubr.f32.mxu0 0.0
        %1592 = vmatmul.mubr.f32.gmra.mxu0 %v1525
        %v1593 = vpop.f32.mrf.mxu0
        %v1594 = vadd.f32 %v1522, %v1593
        %v1595 = vpop.f32.mrf.mxu0
        %1596 = vdwg.mxu0
        %v1597 = vadd.f32 %v714, %v1594
        %v1598 = vld [vmem:[%s687] sm:$0x1]
        %v1599 = vld [vmem:[%s690] sm:$0x1]
        %v1600 = vsel %vm717, %v1597, 0.0
        %1601 = vadd.xlane.f32.xlu0 %v1600
        %v1602 = vpop.xlane.xlu0 %1601
        %v1603 = vmul.f32 %v1602, %v721
        %v1604 = vsub.f32 %v1597, %v1603
        %v1605 = vmul.f32 %v1604, %v1604
        %v1606 = vsel %vm717, %v1605, 0.0
        %1607 = vadd.xlane.f32.xlu0 %v1606
        %v1608 = vpop.xlane.xlu0 %1607
        %v1609 = vmul.f32 %v1608, %v721
        %v1610 = vadd.f32 %v1609, 1e-05
        %v1611 = vrsqrt.pop %v1610
        %v1612 = vmul.f32 %v1604, %v1611
        %v1614 = vlaneseq
        %v1615 = vshrl.u32 %v1614, 7
        %v1616 = vsub.s32 0, %v1615
        %v1617 = vrot.slane %v1598, %v1616
        %v1619 = vmul.f32 %v1612, %v1617
        %v1621 = vlaneseq
        %v1622 = vshrl.u32 %v1621, 7
        %v1623 = vsub.s32 0, %v1622
        %v1624 = vrot.slane %v1599, %v1623
        %v1626 = vadd.f32 %v1619, %v1624
        %v1627 = vld [vmem:[%s695] sm:$0xff]
        %v1628 = vld [vmem:[%s695 + $0x8] sm:$0xff]
        %v1629 = vld [vmem:[%s695 + $0x10] sm:$0xff]
        %v1630 = vld [vmem:[%s695 + $0x18] sm:$0xff]
        %v1631 = vld [vmem:[%s698] sm:$0x1]
        %v1633 = vlaneseq
        %v1634 = vshrl.u32 %v1633, 7
        %v1635 = vsub.s32 0, %v1634
        %v1636 = vrot.slane %v1631, %v1635
        %v1639 = vsel %vm717, %v1626, 0
        %1641 = vmatprep.subr.mxu0 0.0
        %1642 = vmatpush1.msra.mxu0 0.0
        %1643 = vmatprep.subr.mxu0 0.0
        %1644 = vmatpush1.msra.mxu0 0.0
        %1645 = vmatprep.subr.mxu0 0.0
        %1646 = vmatpush1.msra.mxu0 0.0
        %1647 = vmatprep.subr.mxu0 0.0
        %1648 = vmatpush1.msra.mxu0 0.0
        %1649 = vmatprep.subr.mxu0 0.0
        %1650 = vmatpush1.msra.mxu0 0.0
        %1651 = vmatprep.subr.mxu0 0.0
        %1652 = vmatpush1.msra.mxu0 0.0
        %1653 = vmatprep.subr.mxu0 0.0
        %1654 = vmatpush1.msra.mxu0 0.0
        %1655 = vmatprep.subr.mxu0 0.0
        %1656 = vmatpush1.msra.mxu0 0.0
        %1657 = vmatprep.subr.mxu0 0.0
        %1658 = vmatpush1.msra.mxu0 0.0
        %1659 = vmatprep.subr.mxu0 0.0
        %1660 = vmatpush1.msra.mxu0 0.0
        %1661 = vmatprep.subr.mxu0 0.0
        %1662 = vmatpush1.msra.mxu0 0.0
        %1663 = vmatprep.subr.mxu0 0.0
        %1664 = vmatpush1.msra.mxu0 0.0
        %1665 = vmatprep.subr.mxu0 0.0
        %1666 = vmatpush1.msra.mxu0 %v1630
        %1667 = vmatprep.subr.mxu0 0.0
        %1668 = vmatpush1.msra.mxu0 %v1629
        %1669 = vmatprep.subr.mxu0 0.0
        %1670 = vmatpush1.msra.mxu0 %v1628
        %1671 = vmatprep.subr.mxu0 0.0
        %1672 = vmatpush1.msra.mxu0 %v1627
        %1673 = vmatprep.subr.mxu0 0.0
        %1674 = vmatpush2.msra.mxu0 0.0
        %1675 = vmatprep.subr.mxu0 0.0
        %1676 = vmatpush2.msra.mxu0 0.0
        %1677 = vmatprep.subr.mxu0 0.0
        %1678 = vmatpush2.msra.mxu0 0.0
        %1679 = vmatprep.subr.mxu0 0.0
        %1680 = vmatpush2.msra.mxu0 0.0
        %1681 = vmatprep.subr.mxu0 0.0
        %1682 = vmatpush2.msra.mxu0 0.0
        %1683 = vmatprep.subr.mxu0 0.0
        %1684 = vmatpush2.msra.mxu0 0.0
        %1685 = vmatprep.subr.mxu0 0.0
        %1686 = vmatpush2.msra.mxu0 0.0
        %1687 = vmatprep.subr.mxu0 0.0
        %1688 = vmatpush2.msra.mxu0 0.0
        %1689 = vmatprep.subr.mxu0 0.0
        %1690 = vmatpush2.msra.mxu0 0.0
        %1691 = vmatprep.subr.mxu0 0.0
        %1692 = vmatpush2.msra.mxu0 0.0
        %1693 = vmatprep.subr.mxu0 0.0
        %1694 = vmatpush2.msra.mxu0 0.0
        %1695 = vmatprep.subr.mxu0 0.0
        %1696 = vmatpush2.msra.mxu0 0.0
        %1697 = vmatprep.subr.mxu0 0.0
        %1698 = vmatpush2.msra.mxu0 0.0
        %1699 = vmatprep.subr.mxu0 0.0
        %1700 = vmatpush2.msra.mxu0 0.0
        %1701 = vmatprep.subr.mxu0 0.0
        %1702 = vmatpush2.msra.mxu0 0.0
        %1703 = vmatprep.subr.mxu0 0.0
        %1704 = vmatpush2.msra.mxu0 0.0
        %1705 = vmatprep.mubr.f32.mxu0 0.0
        %1706 = vmatmul.mubr.f32.gmra.mxu0 %v1639
        %v1707 = vpop.f32.mrf.mxu0
        %v1708 = vadd.f32 %v1636, %v1707
        %v1709 = vpop.f32.mrf.mxu0
        %1710 = vdwg.mxu0
        %v1711 = vmax.f32 %v1708, 0.0
        %v1712 = vld [vmem:[%s703] sm:$0xff]
        %v1713 = vld [vmem:[%s703 + $0x8] sm:$0xff]
        %v1714 = vld [vmem:[%s703 + $0x10] sm:$0xff]
        %v1715 = vld [vmem:[%s703 + $0x18] sm:$0xff]
        %v1716 = vld [vmem:[%s703 + $0x20] sm:$0xff]
        %v1717 = vld [vmem:[%s703 + $0x28] sm:$0xff]
        %v1718 = vld [vmem:[%s703 + $0x30] sm:$0xff]
        %v1719 = vld [vmem:[%s703 + $0x38] sm:$0xff]
        %v1720 = vld [vmem:[%s703 + $0x40] sm:$0xff]
        %v1721 = vld [vmem:[%s703 + $0x48] sm:$0xff]
        %v1722 = vld [vmem:[%s703 + $0x50] sm:$0xff]
        %v1723 = vld [vmem:[%s703 + $0x58] sm:$0xff]
        %v1724 = vld [vmem:[%s703 + $0x60] sm:$0xff]
        %v1725 = vld [vmem:[%s703 + $0x68] sm:$0xff]
        %v1726 = vld [vmem:[%s703 + $0x70] sm:$0xff]
        %v1727 = vld [vmem:[%s703 + $0x78] sm:$0xff]
        %v1728 = vld [vmem:[%s706] sm:$0x1]
        %v1730 = vlaneseq
        %v1731 = vshrl.u32 %v1730, 7
        %v1732 = vsub.s32 0, %v1731
        %v1733 = vrot.slane %v1728, %v1732
        %1735 = vmatprep.subr.mxu0 0.0
        %1736 = vmatpush1.msra.mxu0 %v1727
        %1737 = vmatprep.subr.mxu0 0.0
        %1738 = vmatpush1.msra.mxu0 %v1726
        %1739 = vmatprep.subr.mxu0 0.0
        %1740 = vmatpush1.msra.mxu0 %v1725
        %1741 = vmatprep.subr.mxu0 0.0
        %1742 = vmatpush1.msra.mxu0 %v1724
        %1743 = vmatprep.subr.mxu0 0.0
        %1744 = vmatpush1.msra.mxu0 %v1723
        %1745 = vmatprep.subr.mxu0 0.0
        %1746 = vmatpush1.msra.mxu0 %v1722
        %1747 = vmatprep.subr.mxu0 0.0
        %1748 = vmatpush1.msra.mxu0 %v1721
        %1749 = vmatprep.subr.mxu0 0.0
        %1750 = vmatpush1.msra.mxu0 %v1720
        %1751 = vmatprep.subr.mxu0 0.0
        %1752 = vmatpush1.msra.mxu0 %v1719
        %1753 = vmatprep.subr.mxu0 0.0
        %1754 = vmatpush1.msra.mxu0 %v1718
        %1755 = vmatprep.subr.mxu0 0.0
        %1756 = vmatpush1.msra.mxu0 %v1717
        %1757 = vmatprep.subr.mxu0 0.0
        %1758 = vmatpush1.msra.mxu0 %v1716
        %1759 = vmatprep.subr.mxu0 0.0
        %1760 = vmatpush1.msra.mxu0 %v1715
        %1761 = vmatprep.subr.mxu0 0.0
        %1762 = vmatpush1.msra.mxu0 %v1714
        %1763 = vmatprep.subr.mxu0 0.0
        %1764 = vmatpush1.msra.mxu0 %v1713
        %1765 = vmatprep.subr.mxu0 0.0
        %1766 = vmatpush1.msra.mxu0 %v1712
        %1767 = vmatprep.subr.mxu0 0.0
        %1768 = vmatpush2.msra.mxu0 0.0
        %1769 = vmatprep.subr.mxu0 0.0
        %1770 = vmatpush2.msra.mxu0 0.0
        %1771 = vmatprep.subr.mxu0 0.0
        %1772 = vmatpush2.msra.mxu0 0.0
        %1773 = vmatprep.subr.mxu0 0.0
        %1774 = vmatpush2.msra.mxu0 0.0
        %1775 = vmatprep.subr.mxu0 0.0
        %1776 = vmatpush2.msra.mxu0 0.0
        %1777 = vmatprep.subr.mxu0 0.0
        %1778 = vmatpush2.msra.mxu0 0.0
        %1779 = vmatprep.subr.mxu0 0.0
        %1780 = vmatpush2.msra.mxu0 0.0
        %1781 = vmatprep.subr.mxu0 0.0
        %1782 = vmatpush2.msra.mxu0 0.0
        %1783 = vmatprep.subr.mxu0 0.0
        %1784 = vmatpush2.msra.mxu0 0.0
        %1785 = vmatprep.subr.mxu0 0.0
        %1786 = vmatpush2.msra.mxu0 0.0
        %1787 = vmatprep.subr.mxu0 0.0
        %1788 = vmatpush2.msra.mxu0 0.0
        %1789 = vmatprep.subr.mxu0 0.0
        %1790 = vmatpush2.msra.mxu0 0.0
        %1791 = vmatprep.subr.mxu0 0.0
        %1792 = vmatpush2.msra.mxu0 0.0
        %1793 = vmatprep.subr.mxu0 0.0
        %1794 = vmatpush2.msra.mxu0 0.0
        %1795 = vmatprep.subr.mxu0 0.0
        %1796 = vmatpush2.msra.mxu0 0.0
        %1797 = vmatprep.subr.mxu0 0.0
        %1798 = vmatpush2.msra.mxu0 0.0
        %1799 = vmatprep.mubr.f32.mxu0 0.0
        %1800 = vmatmul.mubr.f32.gmra.mxu0 %v1711
        %v1801 = vpop.f32.mrf.mxu0
        %v1802 = vadd.f32 %v1733, %v1801
        %v1803 = vpop.f32.mrf.mxu0
        %1804 = vdwg.mxu0
        %v1805 = vadd.f32 %v1597, %v1802
        %1806 = vst.msk [vmem:[#allocation2] sm:$0xff] %vm717, %v1805
        %p1807 = scmp.eq.s32.totalorder %s35, 1
        // Predicated region
        $region89: #{tpu_custom_call.1} parent=83 // pred_check
          %p1808 = pneg %p1807
        $region90: #{tpu_custom_call.1} parent=83 // pred_check_branch
          %1810 = sbr.rel (%p1808) target = $region92
        $region91: #{tpu_custom_call.1} parent=83 // pred_region
          %v1811 = vld [vmem:[%s12] sm:$0x1]
          %v1812 = vld [vmem:[%s13] sm:$0x1]
          %v1813 = vsel %vm717, %v1805, 0.0
          %1814 = vadd.xlane.f32.xlu0 %v1813
          %v1815 = vpop.xlane.xlu0 %1814
          %v1816 = vmul.f32 %v1815, %v721
          %v1817 = vsub.f32 %v1805, %v1816
          %v1818 = vmul.f32 %v1817, %v1817
          %v1819 = vsel %vm717, %v1818, 0.0
          %1820 = vadd.xlane.f32.xlu0 %v1819
          %v1821 = vpop.xlane.xlu0 %1820
          %v1822 = vmul.f32 %v1821, %v721
          %v1823 = vadd.f32 %v1822, 1e-05
          %v1824 = vrsqrt.pop %v1823
          %v1825 = vmul.f32 %v1817, %v1824
          %v1827 = vlaneseq
          %v1828 = vshrl.u32 %v1827, 7
          %v1829 = vsub.s32 0, %v1828
          %v1830 = vrot.slane %v1811, %v1829
          %v1832 = vmul.f32 %v1825, %v1830
          %v1834 = vlaneseq
          %v1835 = vshrl.u32 %v1834, 7
          %v1836 = vsub.s32 0, %v1835
          %v1837 = vrot.slane %v1812, %v1836
          %v1839 = vadd.f32 %v1832, %v1837
          %v1840 = vld [vmem:[%s14] sm:$0xff]
          %v1841 = vld [vmem:[%s14 + $0x8] sm:$0xff]
          %v1842 = vld [vmem:[%s14 + $0x10] sm:$0xff]
          %v1843 = vld [vmem:[%s14 + $0x18] sm:$0xff]
          %v1844 = vld [vmem:[%s15] sm:$0x1]
          %v1846 = vlaneseq
          %v1847 = vshrl.u32 %v1846, 7
          %v1848 = vsub.s32 0, %v1847
          %v1849 = vrot.slane %v1844, %v1848
          %v1852 = vsel %vm717, %v1839, 0
          %1854 = vmatprep.subr.mxu0 0.0
          %1855 = vmatpush1.msra.mxu0 0.0
          %1856 = vmatprep.subr.mxu0 0.0
          %1857 = vmatpush1.msra.mxu0 0.0
          %1858 = vmatprep.subr.mxu0 0.0
          %1859 = vmatpush1.msra.mxu0 0.0
          %1860 = vmatprep.subr.mxu0 0.0
          %1861 = vmatpush1.msra.mxu0 0.0
          %1862 = vmatprep.subr.mxu0 0.0
          %1863 = vmatpush1.msra.mxu0 0.0
          %1864 = vmatprep.subr.mxu0 0.0
          %1865 = vmatpush1.msra.mxu0 0.0
          %1866 = vmatprep.subr.mxu0 0.0
          %1867 = vmatpush1.msra.mxu0 0.0
          %1868 = vmatprep.subr.mxu0 0.0
          %1869 = vmatpush1.msra.mxu0 0.0
          %1870 = vmatprep.subr.mxu0 0.0
          %1871 = vmatpush1.msra.mxu0 0.0
          %1872 = vmatprep.subr.mxu0 0.0
          %1873 = vmatpush1.msra.mxu0 0.0
          %1874 = vmatprep.subr.mxu0 0.0
          %1875 = vmatpush1.msra.mxu0 0.0
          %1876 = vmatprep.subr.mxu0 0.0
          %1877 = vmatpush1.msra.mxu0 0.0
          %1878 = vmatprep.subr.mxu0 0.0
          %1879 = vmatpush1.msra.mxu0 %v1843
          %1880 = vmatprep.subr.mxu0 0.0
          %1881 = vmatpush1.msra.mxu0 %v1842
          %1882 = vmatprep.subr.mxu0 0.0
          %1883 = vmatpush1.msra.mxu0 %v1841
          %1884 = vmatprep.subr.mxu0 0.0
          %1885 = vmatpush1.msra.mxu0 %v1840
          %1886 = vmatprep.subr.mxu0 0.0
          %1887 = vmatpush2.msra.mxu0 0.0
          %1888 = vmatprep.subr.mxu0 0.0
          %1889 = vmatpush2.msra.mxu0 0.0
          %1890 = vmatprep.subr.mxu0 0.0
          %1891 = vmatpush2.msra.mxu0 0.0
          %1892 = vmatprep.subr.mxu0 0.0
          %1893 = vmatpush2.msra.mxu0 0.0
          %1894 = vmatprep.subr.mxu0 0.0
          %1895 = vmatpush2.msra.mxu0 0.0
          %1896 = vmatprep.subr.mxu0 0.0
          %1897 = vmatpush2.msra.mxu0 0.0
          %1898 = vmatprep.subr.mxu0 0.0
          %1899 = vmatpush2.msra.mxu0 0.0
          %1900 = vmatprep.subr.mxu0 0.0
          %1901 = vmatpush2.msra.mxu0 0.0
          %1902 = vmatprep.subr.mxu0 0.0
          %1903 = vmatpush2.msra.mxu0 0.0
          %1904 = vmatprep.subr.mxu0 0.0
          %1905 = vmatpush2.msra.mxu0 0.0
          %1906 = vmatprep.subr.mxu0 0.0
          %1907 = vmatpush2.msra.mxu0 0.0
          %1908 = vmatprep.subr.mxu0 0.0
          %1909 = vmatpush2.msra.mxu0 0.0
          %1910 = vmatprep.subr.mxu0 0.0
          %1911 = vmatpush2.msra.mxu0 0.0
          %1912 = vmatprep.subr.mxu0 0.0
          %1913 = vmatpush2.msra.mxu0 0.0
          %1914 = vmatprep.subr.mxu0 0.0
          %1915 = vmatpush2.msra.mxu0 0.0
          %1916 = vmatprep.subr.mxu0 0.0
          %1917 = vmatpush2.msra.mxu0 0.0
          %1918 = vmatprep.mubr.f32.mxu0 0.0
          %1919 = vmatmul.mubr.f32.gmra.mxu0 %v1852
          %v1920 = vpop.f32.mrf.mxu0
          %v1921 = vadd.f32 %v1849, %v1920
          %v1922 = vpop.f32.mrf.mxu0
          %1923 = vdwg.mxu0
          %1924 = vst [vmem:[%s661] sm:$0xff] %v1921
        $region92: #{tpu_custom_call.1} parent=83 // pred_fallthru
          _
        %s1925 = sand.u32 %s446, 1
        %s1926 = scalar_lea.sflag [#allocation4], %s1925
        %s1927 = sand.u32 %s446, 1
        %s1928 = smul.addr %s1927, 8
        %s1929 = scalar_lea.vmem [#allocation3], %s1928
        // Predicated region
        $region93: #{tpu_custom_call.1} parent=83 // pred_check
          %p1930 = pneg %p456
        $region94: #{tpu_custom_call.1} parent=83 // pred_check_branch
          %1932 = sbr.rel (%p1930) target = $region96
        $region95: #{tpu_custom_call.1} parent=83 // pred_region
          %s1934 = ssub.s32 128, 128
          %1935 = vsyncadd %s1926, %s1934
          %s1936 = smul.addr %s34, 128
          %s1937 = scalar_lea.hbm %s16, %s1936
          %s1939 = sshll.u32 %s1929, 4
          %s1940 = int_to_ptr.vmem [resolvable:$true] %s1939
          %1942 = dma.vmem_to_hbm [thread:$0]  %s1940, 128, %s1937, %s1926
        $region96: #{tpu_custom_call.1} parent=83 // pred_fallthru
          _
      $region84: #{tpu_custom_call.1} parent=5 // pred_fallthru
        _
      %p1943 = scmp.le.s32.totalorder 2, %s25
      // Predicated region
      $region97: #{tpu_custom_call.1} parent=5 // pred_check
        %p1944 = pneg %p1943
      $region98: #{tpu_custom_call.1} parent=5 // pred_check_branch
        %1946 = sbr.rel (%p1944) target = $region100
      $region99: #{tpu_custom_call.1} parent=5 // pred_region
        %s1947 = ssub.s32 %s25, 2
        // Predicated region
        $region101: #{tpu_custom_call.1} parent=99 // pred_check
          %p1948 = pneg %p462
        $region102: #{tpu_custom_call.1} parent=99 // pred_check_branch
          %1950 = sbr.rel (%p1948) target = $region104
        $region103: #{tpu_custom_call.1} parent=99 // pred_region
          %s1951 = sand.u32 %s447, 1
          %s1952 = scalar_lea.sflag [#allocation4], %s1951
          %s1953 = sand.u32 %s447, 1
          %s1954 = smul.addr %s1953, 8
          %s1955 = scalar_lea.vmem [#allocation3], %s1954
          %1956 = dma.done %s1952, 128
        $region104: #{tpu_custom_call.1} parent=99 // pred_fallthru
          _
      $region100: #{tpu_custom_call.1} parent=5 // pred_fallthru
        _
    $region6: #{tpu_custom_call.1} parent=1 // loop_footer
      %s29 = sadd.s32 1, %s25
    $region7: #{tpu_custom_call.1} parent=1 // loop_footer_branch
      %24 = sbr.rel target = $region3
    $region8: #{tpu_custom_call.1} parent=1 // loop_exit
      _
    %1957 = vsyncpa [#allocation4], 1
    %s1958 = scalar_lea.sflag [#allocation4], 1
    %1959 = vsyncpa %s1958, 1

</llo_original>
